<compile_context>
chip_gen: v7x
topology: tpu7x:2x2x1
jax: 0.10.0
libtpu: 0.0.40
codegen_flags: <defaults>
</compile_context>

<pallas_src>
import jax
import jax.numpy as jnp
from jax import lax
from jax.experimental import pallas as pl
from jax.experimental.pallas import tpu as pltpu


def _pick_time_block(s):
    """Largest T_BLK in {32,16,8} dividing S (else one full-extent block)."""
    for cand in (32, 16, 8):
        if s % cand == 0:
            return cand
    return s


# ---------------------------------------------------------------------------
# Fused kernel: per grid step, project T_BLK timesteps (one MXU GEMM), then
# run the serial cell update for those T_BLK steps with h/c in VMEM scratch.
# ---------------------------------------------------------------------------
def _fused_lstm_kernel(x_ref, w_ih_ref, w_hh_ref, b_ref,      # inputs
                       hseq_ref, c_final_ref,                 # outputs
                       h_scr, c_scr, z_scr):                  # VMEM scratch
    """One time-block per grid iteration.

    x_ref     : (T_BLK, B, D)   time-major input block (pipelined in)
    w_ih_ref  : (D, 4H)         packed input->gate weights (VMEM resident)
    w_hh_ref  : (H, 4H)         packed hidden->gate weights (VMEM resident)
    b_ref     : (1, 4H)         folded bias (b_ih + b_hh)
    hseq_ref  : (T_BLK, B, H)   hidden states for this block (pipelined out)
    c_final_ref: (B, H)         final cell state (constant block index,
                                written only on the last grid step)
    h_scr/c_scr: (B, H) f32     recurrence carry across grid steps
    z_scr     : (T_BLK, B, 4H)  f32 block-local input projection (never HBM)
    """
    tg = pl.program_id(0)
    t_blk, b_sz, d_in = x_ref.shape
    hid = w_hh_ref.shape[0]
    h4 = w_hh_ref.shape[1]

    @pl.when(tg == 0)
    def _init():
        h_scr[...] = jnp.zeros_like(h_scr)
        c_scr[...] = jnp.zeros_like(c_scr)

    # --- hoisted input projection for the whole time block: one MXU GEMM
    # (T_BLK*B, D) @ (D, 4H) with f32 accumulation; operands may be bf16.
    x_blk = x_ref[...].astype(w_ih_ref.dtype)                 # (T_BLK, B, D)
    z2 = jnp.dot(x_blk.reshape(t_blk * b_sz, d_in), w_ih_ref[...],
                 preferred_element_type=jnp.float32) + b_ref[...]
    z_scr[...] = z2.reshape(t_blk, b_sz, h4)

    # Lane mask selecting the 'g' (cell-candidate) range of the packed gates,
    # hoisted out of the loop (gate order i, f, g, o along the 4H axis).
    lane = lax.broadcasted_iota(jnp.int32, (b_sz, h4), 1)
    g_mask = (lane >= 2 * hid) & (lane < 3 * hid)

    def step(t_local, carry):
        h, c = carry
        z_t = z_scr[t_local]                                  # (B, 4H) f32
        # Single packed-gate MXU matmul: (B, H) @ (H, 4H) -> (B, 4H), f32 acc.
        pre = z_t + jnp.dot(h.astype(w_hh_ref.dtype), w_hh_ref[...],
                            preferred_element_type=jnp.float32)
        # Full-vreg activations on the EUP + one VPU select instead of four
        # sub-lane slice activations.
        gates = jnp.where(g_mask, jnp.tanh(pre), jax.nn.sigmoid(pre))
        i_g = gates[:, 0 * hid:1 * hid]
        f_g = gates[:, 1 * hid:2 * hid]
        g_g = gates[:, 2 * hid:3 * hid]
        o_g = gates[:, 3 * hid:4 * hid]
        c_new = f_g * c + i_g * g_g
        h_new = o_g * jnp.tanh(c_new)
        hseq_ref[t_local] = h_new.astype(hseq_ref.dtype)
        return h_new, c_new

    h_last, c_last = lax.fori_loop(0, t_blk, step,
                                   (h_scr[...], c_scr[...]), unroll=True)
    h_scr[...] = h_last
    c_scr[...] = c_last

    # Final cell state only (hT duplicates hseq[:, -1]; recovered in wrapper).
    @pl.when(tg == pl.num_programs(0) - 1)
    def _finalize():
        c_final_ref[...] = c_last.astype(c_final_ref.dtype)


# ---------------------------------------------------------------------------
# Module-level wrappers
# ---------------------------------------------------------------------------
def paper_lstm_module(x, w_ih, w_hh, b, *, matmul_dtype=jnp.bfloat16):
    """x: (B, S, D) -> (h_seq (B, S, H), (h_T (B, H), c_T (B, H))).

    w_ih: (D, 4H), w_hh: (H, 4H), b: (1, 4H) packed in gate order (i, f, g, o).
    matmul_dtype: bf16 by default (MXU-native on v5e/v6e/v7x); accumulation
    and the elementwise path stay f32.  Pass jnp.float32 for bit-accuracy.
    Best layout: B a multiple of 8 (sublane count).
    """
    B, S, D = x.shape
    H = w_hh.shape[0]
    h4 = 4 * H
    t_blk = _pick_time_block(S)
    n_blocks = S // t_blk

    # Time-major view so the recurrence kernel's last two block dims stay
    # full-extent; this is one cheap XLA transpose next to the serial loop.
    x_tm = jnp.transpose(x, (1, 0, 2))                        # (S, B, D)
    w_ih_c = w_ih.astype(matmul_dtype)
    w_hh_c = w_hh.astype(matmul_dtype)

    itm = jnp.dtype(matmul_dtype).itemsize
    bytes_accessed = (S * B * D * x_tm.dtype.itemsize
                      + D * h4 * itm + H * h4 * itm + h4 * 4
                      + S * B * H * 4 + B * H * 4)

    hseq_tm, c_final = pl.pallas_call(
        _fused_lstm_kernel,
        out_shape=(
            jax.ShapeDtypeStruct((S, B, H), jnp.float32),
            jax.ShapeDtypeStruct((B, H), jnp.float32),
        ),
        grid_spec=pltpu.PrefetchScalarGridSpec(
            num_scalar_prefetch=0,
            grid=(n_blocks,),
            in_specs=[
                pl.BlockSpec((t_blk, B, D), lambda t: (t, 0, 0)),
                pl.BlockSpec((D, h4), lambda t: (0, 0)),
                pl.BlockSpec((H, h4), lambda t: (0, 0)),
                pl.BlockSpec((1, h4), lambda t: (0, 0)),
            ],
            out_specs=[
                pl.BlockSpec((t_blk, B, H), lambda t: (t, 0, 0)),
                pl.BlockSpec((B, H), lambda t: (0, 0)),
            ],
            scratch_shapes=[
                pltpu.VMEM((B, H), jnp.float32),        # h carry
                pltpu.VMEM((B, H), jnp.float32),        # c carry
                pltpu.VMEM((t_blk, B, h4), jnp.float32),  # block-local z
            ],
        ),
        compiler_params=pltpu.CompilerParams(
            dimension_semantics=("arbitrary",)),  # serial recurrence axis
        cost_estimate=pl.CostEstimate(
            flops=2 * S * B * h4 * (D + H),
            transcendentals=9 * S * B * H,
            bytes_accessed=bytes_accessed),
    )(x_tm, w_ih_c, w_hh_c, b)

    h_seq = jnp.transpose(hseq_tm, (1, 0, 2))                 # (B, S, H)
    h_final = h_seq[:, -1]                                    # == last step h
    return h_seq, (h_final, c_final)


def init_encoder_decoder_params(input_size, hidden_size, key):
    """PyTorch-style uniform(-1/sqrt(H), 1/sqrt(H)) init, packed-gate layout."""
    k1, k2, k3, k4 = jax.random.split(key, 4)
    scale = 1.0 / float(hidden_size) ** 0.5
    h4 = 4 * hidden_size
    w_ih = jax.random.uniform(k1, (input_size, h4), jnp.float32, -scale, scale)
    w_hh = jax.random.uniform(k2, (hidden_size, h4), jnp.float32, -scale, scale)
    b_ih = jax.random.uniform(k3, (1, h4), jnp.float32, -scale, scale)
    b_hh = jax.random.uniform(k4, (1, h4), jnp.float32, -scale, scale)
    return {"w_ih": w_ih, "w_hh": w_hh, "b": b_ih + b_hh}


@jax.jit
def encoder_decoder_forward(params, x_batch):
    # CNN / attention are None in the reference module; encoder LSTM only.
    return paper_lstm_module(x_batch, params["w_ih"], params["w_hh"],
                             params["b"])


# ---------------------------------------------------------------------------
# Pure-JAX reference (lax.scan) for the correctness check
# ---------------------------------------------------------------------------
def _lstm_reference(x, w_ih, w_hh, b):
    B, S, D = x.shape
    H = w_hh.shape[0]

    def step(carry, x_t):
        h, c = carry
        z = x_t @ w_ih + h @ w_hh + b
        i_g = jax.nn.sigmoid(z[:, 0 * H:1 * H])
        f_g = jax.nn.sigmoid(z[:, 1 * H:2 * H])
        g_g = jnp.tanh(z[:, 2 * H:3 * H])
        o_g = jax.nn.sigmoid(z[:, 3 * H:4 * H])
        c_new = f_g * c + i_g * g_g
        h_new = o_g * jnp.tanh(c_new)
        return (h_new, c_new), h_new

    init = (jnp.zeros((B, H), jnp.float32), jnp.zeros((B, H), jnp.float32))
    (hT, cT), hseq = lax.scan(step, init, jnp.transpose(x, (1, 0, 2)))
    return jnp.transpose(hseq, (1, 0, 2)), (hT, cT)


if __name__ == "__main__":
    BATCH, SEQ, INPUT_SIZE, HIDDEN_SIZE = 8, 8, 32, 32

    key = jax.random.PRNGKey(0)
    k_param, k_x = jax.random.split(key)
    params = init_encoder_decoder_params(INPUT_SIZE, HIDDEN_SIZE, k_param)
    x_batch = jax.random.normal(k_x, (BATCH, SEQ, INPUT_SIZE), jnp.float32)

    # Pure-JAX reference.
    h_ref, (hT_ref, cT_ref) = _lstm_reference(
        x_batch, params["w_ih"], params["w_hh"], params["b"])

    # f32-operand path: strict correctness check.
    fwd_f32 = jax.jit(lambda p, xb: paper_lstm_module(
        xb, p["w_ih"], p["w_hh"], p["b"], matmul_dtype=jnp.float32))
    h32, (hT32, cT32) = fwd_f32(params, x_batch)
    jax.block_until_ready((h32, hT32, cT32))
    assert jnp.allclose(h32, h_ref, atol=1e-5, rtol=1e-5)
    assert jnp.allclose(hT32, hT_ref, atol=1e-5, rtol=1e-5)
    assert jnp.allclose(cT32, cT_ref, atol=1e-5, rtol=1e-5)

    # Default bf16-operand path (looser tolerance: per-step bf16 rounding of h
    # and the weights compounds through the recurrence).
    hbf, (hTbf, cTbf) = encoder_decoder_forward(params, x_batch)
    jax.block_until_ready((hbf, hTbf, cTbf))
    assert jnp.allclose(hbf, h_ref, atol=1.5e-1, rtol=1.5e-1)
    assert jnp.allclose(cTbf, cT_ref, atol=1.5e-1, rtol=1.5e-1)

    print("KERNEL_OK")
</pallas_src>

<mosaic_0001>
module attributes {stable_mosaic.version = 11 : i64} {
  func.func @_fused_lstm_kernel(%arg0: i32, %arg1: memref<8x8x32xf32, #tpu.memory_space<vmem>>, %arg2: memref<32x128xf32, #tpu.memory_space<vmem>>, %arg3: memref<32x128xf32, #tpu.memory_space<vmem>>, %arg4: memref<1x128xf32, #tpu.memory_space<vmem>>, %arg5: memref<8x8x32xf32, #tpu.memory_space<vmem>>, %arg6: memref<8x32xf32, #tpu.memory_space<vmem>>, %arg7: memref<8x32xf32, #tpu.memory_space<vmem>>, %arg8: memref<8x32xf32, #tpu.memory_space<vmem>>, %arg9: memref<8x8x128xf32, #tpu.memory_space<vmem>>) attributes {dimension_semantics = [#tpu.dimension_semantics<arbitrary>], iteration_bounds = array<i64: 1>, scalar_prefetch = 0 : i64, scratch_operands = 3 : i64, tpu.core_type = #tpu.core_type<tc>, window_params = [{transform_indices = @transform_0, window_bounds = array<i64: 8, 8, 32>}, {pipeline_mode = #tpu.pipeline_mode<synchronous>, transform_indices = @transform_1, window_bounds = array<i64: 32, 128>}, {pipeline_mode = #tpu.pipeline_mode<synchronous>, transform_indices = @transform_2, window_bounds = array<i64: 32, 128>}, {pipeline_mode = #tpu.pipeline_mode<synchronous>, transform_indices = @transform_3, window_bounds = array<i64: 1, 128>}, {transform_indices = @transform_4, window_bounds = array<i64: 8, 8, 32>}, {pipeline_mode = #tpu.pipeline_mode<synchronous>, transform_indices = @transform_5, window_bounds = array<i64: 8, 32>}]} {
    %c0_i32 = arith.constant 0 : i32
    %0 = arith.cmpi eq, %arg0, %c0_i32 : i32
    %1 = arith.extui %0 : i1 to i32
    %c0_i32_0 = arith.constant 0 : i32
    %2 = arith.cmpi ne, %1, %c0_i32_0 : i32
    scf.if %2 {
      %cst_85 = arith.constant 0.000000e+00 : f32
      %233 = vector.broadcast %cst_85 : f32 to vector<8x32xf32>
      %c0_86 = arith.constant 0 : index
      %c0_87 = arith.constant 0 : index
      %234 = vector.load %arg7[%c0_86, %c0_87] : memref<8x32xf32, #tpu.memory_space<vmem>>, vector<8x32xf32>
      tpu.vector_store %arg7[%c0_86, %c0_87], %233 {strides = array<i32>} : memref<8x32xf32, #tpu.memory_space<vmem>>, vector<8x32xf32>,
      %cst_88 = arith.constant 0.000000e+00 : f32
      %235 = vector.broadcast %cst_88 : f32 to vector<8x32xf32>
      %c0_89 = arith.constant 0 : index
      %c0_90 = arith.constant 0 : index
      %236 = vector.load %arg8[%c0_89, %c0_90] : memref<8x32xf32, #tpu.memory_space<vmem>>, vector<8x32xf32>
      tpu.vector_store %arg8[%c0_89, %c0_90], %235 {strides = array<i32>} : memref<8x32xf32, #tpu.memory_space<vmem>>, vector<8x32xf32>,
    } else {
    }
    %c0 = arith.constant 0 : index
    %c0_1 = arith.constant 0 : index
    %c0_2 = arith.constant 0 : index
    %3 = vector.load %arg1[%c0, %c0_1, %c0_2] : memref<8x8x32xf32, #tpu.memory_space<vmem>>, vector<8x8x32xf32>
    %4 = vector.shape_cast %3 : vector<8x8x32xf32> to vector<64x32xf32>
    %c0_3 = arith.constant 0 : index
    %c0_4 = arith.constant 0 : index
    %5 = vector.load %arg2[%c0_3, %c0_4] : memref<32x128xf32, #tpu.memory_space<vmem>>, vector<32x128xf32>
    %cst = arith.constant dense<0.000000e+00> : vector<64x128xf32>
    %6 = tpu.matmul %4, %5, %cst {dimension_numbers = #tpu.dot_dimension_numbers<[1], [0], [0], [1], [0, 0, 1, 1], [], []>} : vector<64x32xf32>, vector<32x128xf32>, vector<64x128xf32> -> vector<64x128xf32>
    %c0_5 = arith.constant 0 : index
    %c0_6 = arith.constant 0 : index
    %7 = vector.load %arg4[%c0_5, %c0_6] : memref<1x128xf32, #tpu.memory_space<vmem>>, vector<1x128xf32>
    %8 = vector.broadcast %7 : vector<1x128xf32> to vector<64x128xf32>
    %9 = arith.addf %6, %8 : vector<64x128xf32>
    %10 = vector.shape_cast %9 : vector<64x128xf32> to vector<8x8x128xf32>
    %c0_7 = arith.constant 0 : index
    %c0_8 = arith.constant 0 : index
    %c0_9 = arith.constant 0 : index
    %11 = vector.load %arg9[%c0_7, %c0_8, %c0_9] : memref<8x8x128xf32, #tpu.memory_space<vmem>>, vector<8x8x128xf32>
    tpu.vector_store %arg9[%c0_7, %c0_8, %c0_9], %10 {strides = array<i32>} : memref<8x8x128xf32, #tpu.memory_space<vmem>>, vector<8x8x128xf32>,
    %12 = tpu.iota {dimensions = array<i32: 1>} : vector<8x128xi32>
    %c64_i32 = arith.constant 64 : i32
    %13 = vector.broadcast %c64_i32 : i32 to vector<8x128xi32>
    %14 = arith.cmpi sge, %12, %13 : vector<8x128xi32>
    %c96_i32 = arith.constant 96 : i32
    %15 = vector.broadcast %c96_i32 : i32 to vector<8x128xi32>
    %16 = arith.cmpi slt, %12, %15 : vector<8x128xi32>
    %17 = arith.andi %14, %16 : vector<8x128xi1>
    %c0_10 = arith.constant 0 : index
    %c0_11 = arith.constant 0 : index
    %18 = vector.load %arg7[%c0_10, %c0_11] : memref<8x32xf32, #tpu.memory_space<vmem>>, vector<8x32xf32>
    %c0_12 = arith.constant 0 : index
    %c0_13 = arith.constant 0 : index
    %19 = vector.load %arg8[%c0_12, %c0_13] : memref<8x32xf32, #tpu.memory_space<vmem>>, vector<8x32xf32>
    %c0_i32_14 = arith.constant 0 : i32
    %20 = arith.index_cast %c0_i32_14 : i32 to index
    %c0_15 = arith.constant 0 : index
    %c0_16 = arith.constant 0 : index
    %21 = vector.load %arg9[%20, %c0_15, %c0_16] : memref<8x8x128xf32, #tpu.memory_space<vmem>>, vector<1x8x128xf32>
    %22 = vector.shape_cast %21 : vector<1x8x128xf32> to vector<8x128xf32>
    %c0_17 = arith.constant 0 : index
    %c0_18 = arith.constant 0 : index
    %23 = vector.load %arg3[%c0_17, %c0_18] : memref<32x128xf32, #tpu.memory_space<vmem>>, vector<32x128xf32>
    %cst_19 = arith.constant dense<0.000000e+00> : vector<8x128xf32>
    %24 = tpu.matmul %18, %23, %cst_19 {dimension_numbers = #tpu.dot_dimension_numbers<[1], [0], [0], [1], [0, 0, 1, 1], [], []>} : vector<8x32xf32>, vector<32x128xf32>, vector<8x128xf32> -> vector<8x128xf32>
    %25 = arith.addf %22, %24 : vector<8x128xf32>
    %26 = math.tanh %25 : vector<8x128xf32>
    %27 = arith.negf %25 : vector<8x128xf32>
    %28 = math.exp %27 : vector<8x128xf32>
    %cst_20 = arith.constant 1.000000e+00 : f32
    %29 = vector.broadcast %cst_20 : f32 to vector<8x128xf32>
    %30 = arith.addf %29, %28 : vector<8x128xf32>
    %31 = arith.divf %29, %30 : vector<8x128xf32>
    %32 = arith.select %17, %26, %31 : vector<8x128xi1>, vector<8x128xf32>
    %33 = vector.extract_strided_slice %32 {offsets = [0, 0], sizes = [8, 32], strides = [1, 1]} : vector<8x128xf32> to vector<8x32xf32>
    %34 = vector.extract_strided_slice %32 {offsets = [0, 32], sizes = [8, 32], strides = [1, 1]} : vector<8x128xf32> to vector<8x32xf32>
    %35 = vector.extract_strided_slice %32 {offsets = [0, 64], sizes = [8, 32], strides = [1, 1]} : vector<8x128xf32> to vector<8x32xf32>
    %36 = vector.extract_strided_slice %32 {offsets = [0, 96], sizes = [8, 32], strides = [1, 1]} : vector<8x128xf32> to vector<8x32xf32>
    %37 = arith.mulf %34, %19 : vector<8x32xf32>
    %38 = arith.mulf %33, %35 : vector<8x32xf32>
    %39 = arith.addf %37, %38 : vector<8x32xf32>
    %40 = math.tanh %39 : vector<8x32xf32>
    %41 = arith.mulf %36, %40 : vector<8x32xf32>
    %42 = arith.index_cast %c0_i32_14 : i32 to index
    %c0_21 = arith.constant 0 : index
    %c0_22 = arith.constant 0 : index
    %43 = vector.load %arg5[%42, %c0_21, %c0_22] : memref<8x8x32xf32, #tpu.memory_space<vmem>>, vector<1x8x32xf32>
    %44 = vector.shape_cast %43 : vector<1x8x32xf32> to vector<8x32xf32>
    %45 = vector.shape_cast %41 : vector<8x32xf32> to vector<1x8x32xf32>
    tpu.vector_store %arg5[%42, %c0_21, %c0_22], %45 {strides = array<i32>} : memref<8x8x32xf32, #tpu.memory_space<vmem>>, vector<1x8x32xf32>,
    %c1_i32 = arith.constant 1 : i32
    %46 = arith.index_cast %c1_i32 : i32 to index
    %c0_23 = arith.constant 0 : index
    %c0_24 = arith.constant 0 : index
    %47 = vector.load %arg9[%46, %c0_23, %c0_24] : memref<8x8x128xf32, #tpu.memory_space<vmem>>, vector<1x8x128xf32>
    %48 = vector.shape_cast %47 : vector<1x8x128xf32> to vector<8x128xf32>
    %c0_25 = arith.constant 0 : index
    %c0_26 = arith.constant 0 : index
    %49 = vector.load %arg3[%c0_25, %c0_26] : memref<32x128xf32, #tpu.memory_space<vmem>>, vector<32x128xf32>
    %cst_27 = arith.constant dense<0.000000e+00> : vector<8x128xf32>
    %50 = tpu.matmul %41, %49, %cst_27 {dimension_numbers = #tpu.dot_dimension_numbers<[1], [0], [0], [1], [0, 0, 1, 1], [], []>} : vector<8x32xf32>, vector<32x128xf32>, vector<8x128xf32> -> vector<8x128xf32>
    %51 = arith.addf %48, %50 : vector<8x128xf32>
    %52 = math.tanh %51 : vector<8x128xf32>
    %53 = arith.negf %51 : vector<8x128xf32>
    %54 = math.exp %53 : vector<8x128xf32>
    %cst_28 = arith.constant 1.000000e+00 : f32
    %55 = vector.broadcast %cst_28 : f32 to vector<8x128xf32>
    %56 = arith.addf %55, %54 : vector<8x128xf32>
    %57 = arith.divf %55, %56 : vector<8x128xf32>
    %58 = arith.select %17, %52, %57 : vector<8x128xi1>, vector<8x128xf32>
    %59 = vector.extract_strided_slice %58 {offsets = [0, 0], sizes = [8, 32], strides = [1, 1]} : vector<8x128xf32> to vector<8x32xf32>
    %60 = vector.extract_strided_slice %58 {offsets = [0, 32], sizes = [8, 32], strides = [1, 1]} : vector<8x128xf32> to vector<8x32xf32>
    %61 = vector.extract_strided_slice %58 {offsets = [0, 64], sizes = [8, 32], strides = [1, 1]} : vector<8x128xf32> to vector<8x32xf32>
    %62 = vector.extract_strided_slice %58 {offsets = [0, 96], sizes = [8, 32], strides = [1, 1]} : vector<8x128xf32> to vector<8x32xf32>
    %63 = arith.mulf %60, %39 : vector<8x32xf32>
    %64 = arith.mulf %59, %61 : vector<8x32xf32>
    %65 = arith.addf %63, %64 : vector<8x32xf32>
    %66 = math.tanh %65 : vector<8x32xf32>
    %67 = arith.mulf %62, %66 : vector<8x32xf32>
    %68 = arith.index_cast %c1_i32 : i32 to index
    %c0_29 = arith.constant 0 : index
    %c0_30 = arith.constant 0 : index
    %69 = vector.load %arg5[%68, %c0_29, %c0_30] : memref<8x8x32xf32, #tpu.memory_space<vmem>>, vector<1x8x32xf32>
    %70 = vector.shape_cast %69 : vector<1x8x32xf32> to vector<8x32xf32>
    %71 = vector.shape_cast %67 : vector<8x32xf32> to vector<1x8x32xf32>
    tpu.vector_store %arg5[%68, %c0_29, %c0_30], %71 {strides = array<i32>} : memref<8x8x32xf32, #tpu.memory_space<vmem>>, vector<1x8x32xf32>,
    %c2_i32 = arith.constant 2 : i32
    %72 = arith.index_cast %c2_i32 : i32 to index
    %c0_31 = arith.constant 0 : index
    %c0_32 = arith.constant 0 : index
    %73 = vector.load %arg9[%72, %c0_31, %c0_32] : memref<8x8x128xf32, #tpu.memory_space<vmem>>, vector<1x8x128xf32>
    %74 = vector.shape_cast %73 : vector<1x8x128xf32> to vector<8x128xf32>
    %c0_33 = arith.constant 0 : index
    %c0_34 = arith.constant 0 : index
    %75 = vector.load %arg3[%c0_33, %c0_34] : memref<32x128xf32, #tpu.memory_space<vmem>>, vector<32x128xf32>
    %cst_35 = arith.constant dense<0.000000e+00> : vector<8x128xf32>
    %76 = tpu.matmul %67, %75, %cst_35 {dimension_numbers = #tpu.dot_dimension_numbers<[1], [0], [0], [1], [0, 0, 1, 1], [], []>} : vector<8x32xf32>, vector<32x128xf32>, vector<8x128xf32> -> vector<8x128xf32>
    %77 = arith.addf %74, %76 : vector<8x128xf32>
    %78 = math.tanh %77 : vector<8x128xf32>
    %79 = arith.negf %77 : vector<8x128xf32>
    %80 = math.exp %79 : vector<8x128xf32>
    %cst_36 = arith.constant 1.000000e+00 : f32
    %81 = vector.broadcast %cst_36 : f32 to vector<8x128xf32>
    %82 = arith.addf %81, %80 : vector<8x128xf32>
    %83 = arith.divf %81, %82 : vector<8x128xf32>
    %84 = arith.select %17, %78, %83 : vector<8x128xi1>, vector<8x128xf32>
    %85 = vector.extract_strided_slice %84 {offsets = [0, 0], sizes = [8, 32], strides = [1, 1]} : vector<8x128xf32> to vector<8x32xf32>
    %86 = vector.extract_strided_slice %84 {offsets = [0, 32], sizes = [8, 32], strides = [1, 1]} : vector<8x128xf32> to vector<8x32xf32>
    %87 = vector.extract_strided_slice %84 {offsets = [0, 64], sizes = [8, 32], strides = [1, 1]} : vector<8x128xf32> to vector<8x32xf32>
    %88 = vector.extract_strided_slice %84 {offsets = [0, 96], sizes = [8, 32], strides = [1, 1]} : vector<8x128xf32> to vector<8x32xf32>
    %89 = arith.mulf %86, %65 : vector<8x32xf32>
    %90 = arith.mulf %85, %87 : vector<8x32xf32>
    %91 = arith.addf %89, %90 : vector<8x32xf32>
    %92 = math.tanh %91 : vector<8x32xf32>
    %93 = arith.mulf %88, %92 : vector<8x32xf32>
    %94 = arith.index_cast %c2_i32 : i32 to index
    %c0_37 = arith.constant 0 : index
    %c0_38 = arith.constant 0 : index
    %95 = vector.load %arg5[%94, %c0_37, %c0_38] : memref<8x8x32xf32, #tpu.memory_space<vmem>>, vector<1x8x32xf32>
    %96 = vector.shape_cast %95 : vector<1x8x32xf32> to vector<8x32xf32>
    %97 = vector.shape_cast %93 : vector<8x32xf32> to vector<1x8x32xf32>
    tpu.vector_store %arg5[%94, %c0_37, %c0_38], %97 {strides = array<i32>} : memref<8x8x32xf32, #tpu.memory_space<vmem>>, vector<1x8x32xf32>,
    %c3_i32 = arith.constant 3 : i32
    %98 = arith.index_cast %c3_i32 : i32 to index
    %c0_39 = arith.constant 0 : index
    %c0_40 = arith.constant 0 : index
    %99 = vector.load %arg9[%98, %c0_39, %c0_40] : memref<8x8x128xf32, #tpu.memory_space<vmem>>, vector<1x8x128xf32>
    %100 = vector.shape_cast %99 : vector<1x8x128xf32> to vector<8x128xf32>
    %c0_41 = arith.constant 0 : index
    %c0_42 = arith.constant 0 : index
    %101 = vector.load %arg3[%c0_41, %c0_42] : memref<32x128xf32, #tpu.memory_space<vmem>>, vector<32x128xf32>
    %cst_43 = arith.constant dense<0.000000e+00> : vector<8x128xf32>
    %102 = tpu.matmul %93, %101, %cst_43 {dimension_numbers = #tpu.dot_dimension_numbers<[1], [0], [0], [1], [0, 0, 1, 1], [], []>} : vector<8x32xf32>, vector<32x128xf32>, vector<8x128xf32> -> vector<8x128xf32>
    %103 = arith.addf %100, %102 : vector<8x128xf32>
    %104 = math.tanh %103 : vector<8x128xf32>
    %105 = arith.negf %103 : vector<8x128xf32>
    %106 = math.exp %105 : vector<8x128xf32>
    %cst_44 = arith.constant 1.000000e+00 : f32
    %107 = vector.broadcast %cst_44 : f32 to vector<8x128xf32>
    %108 = arith.addf %107, %106 : vector<8x128xf32>
    %109 = arith.divf %107, %108 : vector<8x128xf32>
    %110 = arith.select %17, %104, %109 : vector<8x128xi1>, vector<8x128xf32>
    %111 = vector.extract_strided_slice %110 {offsets = [0, 0], sizes = [8, 32], strides = [1, 1]} : vector<8x128xf32> to vector<8x32xf32>
    %112 = vector.extract_strided_slice %110 {offsets = [0, 32], sizes = [8, 32], strides = [1, 1]} : vector<8x128xf32> to vector<8x32xf32>
    %113 = vector.extract_strided_slice %110 {offsets = [0, 64], sizes = [8, 32], strides = [1, 1]} : vector<8x128xf32> to vector<8x32xf32>
    %114 = vector.extract_strided_slice %110 {offsets = [0, 96], sizes = [8, 32], strides = [1, 1]} : vector<8x128xf32> to vector<8x32xf32>
    %115 = arith.mulf %112, %91 : vector<8x32xf32>
    %116 = arith.mulf %111, %113 : vector<8x32xf32>
    %117 = arith.addf %115, %116 : vector<8x32xf32>
    %118 = math.tanh %117 : vector<8x32xf32>
    %119 = arith.mulf %114, %118 : vector<8x32xf32>
    %120 = arith.index_cast %c3_i32 : i32 to index
    %c0_45 = arith.constant 0 : index
    %c0_46 = arith.constant 0 : index
    %121 = vector.load %arg5[%120, %c0_45, %c0_46] : memref<8x8x32xf32, #tpu.memory_space<vmem>>, vector<1x8x32xf32>
    %122 = vector.shape_cast %121 : vector<1x8x32xf32> to vector<8x32xf32>
    %123 = vector.shape_cast %119 : vector<8x32xf32> to vector<1x8x32xf32>
    tpu.vector_store %arg5[%120, %c0_45, %c0_46], %123 {strides = array<i32>} : memref<8x8x32xf32, #tpu.memory_space<vmem>>, vector<1x8x32xf32>,
    %c4_i32 = arith.constant 4 : i32
    %124 = arith.index_cast %c4_i32 : i32 to index
    %c0_47 = arith.constant 0 : index
    %c0_48 = arith.constant 0 : index
    %125 = vector.load %arg9[%124, %c0_47, %c0_48] : memref<8x8x128xf32, #tpu.memory_space<vmem>>, vector<1x8x128xf32>
    %126 = vector.shape_cast %125 : vector<1x8x128xf32> to vector<8x128xf32>
    %c0_49 = arith.constant 0 : index
    %c0_50 = arith.constant 0 : index
    %127 = vector.load %arg3[%c0_49, %c0_50] : memref<32x128xf32, #tpu.memory_space<vmem>>, vector<32x128xf32>
    %cst_51 = arith.constant dense<0.000000e+00> : vector<8x128xf32>
    %128 = tpu.matmul %119, %127, %cst_51 {dimension_numbers = #tpu.dot_dimension_numbers<[1], [0], [0], [1], [0, 0, 1, 1], [], []>} : vector<8x32xf32>, vector<32x128xf32>, vector<8x128xf32> -> vector<8x128xf32>
    %129 = arith.addf %126, %128 : vector<8x128xf32>
    %130 = math.tanh %129 : vector<8x128xf32>
    %131 = arith.negf %129 : vector<8x128xf32>
    %132 = math.exp %131 : vector<8x128xf32>
    %cst_52 = arith.constant 1.000000e+00 : f32
    %133 = vector.broadcast %cst_52 : f32 to vector<8x128xf32>
    %134 = arith.addf %133, %132 : vector<8x128xf32>
    %135 = arith.divf %133, %134 : vector<8x128xf32>
    %136 = arith.select %17, %130, %135 : vector<8x128xi1>, vector<8x128xf32>
    %137 = vector.extract_strided_slice %136 {offsets = [0, 0], sizes = [8, 32], strides = [1, 1]} : vector<8x128xf32> to vector<8x32xf32>
    %138 = vector.extract_strided_slice %136 {offsets = [0, 32], sizes = [8, 32], strides = [1, 1]} : vector<8x128xf32> to vector<8x32xf32>
    %139 = vector.extract_strided_slice %136 {offsets = [0, 64], sizes = [8, 32], strides = [1, 1]} : vector<8x128xf32> to vector<8x32xf32>
    %140 = vector.extract_strided_slice %136 {offsets = [0, 96], sizes = [8, 32], strides = [1, 1]} : vector<8x128xf32> to vector<8x32xf32>
    %141 = arith.mulf %138, %117 : vector<8x32xf32>
    %142 = arith.mulf %137, %139 : vector<8x32xf32>
    %143 = arith.addf %141, %142 : vector<8x32xf32>
    %144 = math.tanh %143 : vector<8x32xf32>
    %145 = arith.mulf %140, %144 : vector<8x32xf32>
    %146 = arith.index_cast %c4_i32 : i32 to index
    %c0_53 = arith.constant 0 : index
    %c0_54 = arith.constant 0 : index
    %147 = vector.load %arg5[%146, %c0_53, %c0_54] : memref<8x8x32xf32, #tpu.memory_space<vmem>>, vector<1x8x32xf32>
    %148 = vector.shape_cast %147 : vector<1x8x32xf32> to vector<8x32xf32>
    %149 = vector.shape_cast %145 : vector<8x32xf32> to vector<1x8x32xf32>
    tpu.vector_store %arg5[%146, %c0_53, %c0_54], %149 {strides = array<i32>} : memref<8x8x32xf32, #tpu.memory_space<vmem>>, vector<1x8x32xf32>,
    %c5_i32 = arith.constant 5 : i32
    %150 = arith.index_cast %c5_i32 : i32 to index
    %c0_55 = arith.constant 0 : index
    %c0_56 = arith.constant 0 : index
    %151 = vector.load %arg9[%150, %c0_55, %c0_56] : memref<8x8x128xf32, #tpu.memory_space<vmem>>, vector<1x8x128xf32>
    %152 = vector.shape_cast %151 : vector<1x8x128xf32> to vector<8x128xf32>
    %c0_57 = arith.constant 0 : index
    %c0_58 = arith.constant 0 : index
    %153 = vector.load %arg3[%c0_57, %c0_58] : memref<32x128xf32, #tpu.memory_space<vmem>>, vector<32x128xf32>
    %cst_59 = arith.constant dense<0.000000e+00> : vector<8x128xf32>
    %154 = tpu.matmul %145, %153, %cst_59 {dimension_numbers = #tpu.dot_dimension_numbers<[1], [0], [0], [1], [0, 0, 1, 1], [], []>} : vector<8x32xf32>, vector<32x128xf32>, vector<8x128xf32> -> vector<8x128xf32>
    %155 = arith.addf %152, %154 : vector<8x128xf32>
    %156 = math.tanh %155 : vector<8x128xf32>
    %157 = arith.negf %155 : vector<8x128xf32>
    %158 = math.exp %157 : vector<8x128xf32>
    %cst_60 = arith.constant 1.000000e+00 : f32
    %159 = vector.broadcast %cst_60 : f32 to vector<8x128xf32>
    %160 = arith.addf %159, %158 : vector<8x128xf32>
    %161 = arith.divf %159, %160 : vector<8x128xf32>
    %162 = arith.select %17, %156, %161 : vector<8x128xi1>, vector<8x128xf32>
    %163 = vector.extract_strided_slice %162 {offsets = [0, 0], sizes = [8, 32], strides = [1, 1]} : vector<8x128xf32> to vector<8x32xf32>
    %164 = vector.extract_strided_slice %162 {offsets = [0, 32], sizes = [8, 32], strides = [1, 1]} : vector<8x128xf32> to vector<8x32xf32>
    %165 = vector.extract_strided_slice %162 {offsets = [0, 64], sizes = [8, 32], strides = [1, 1]} : vector<8x128xf32> to vector<8x32xf32>
    %166 = vector.extract_strided_slice %162 {offsets = [0, 96], sizes = [8, 32], strides = [1, 1]} : vector<8x128xf32> to vector<8x32xf32>
    %167 = arith.mulf %164, %143 : vector<8x32xf32>
    %168 = arith.mulf %163, %165 : vector<8x32xf32>
    %169 = arith.addf %167, %168 : vector<8x32xf32>
    %170 = math.tanh %169 : vector<8x32xf32>
    %171 = arith.mulf %166, %170 : vector<8x32xf32>
    %172 = arith.index_cast %c5_i32 : i32 to index
    %c0_61 = arith.constant 0 : index
    %c0_62 = arith.constant 0 : index
    %173 = vector.load %arg5[%172, %c0_61, %c0_62] : memref<8x8x32xf32, #tpu.memory_space<vmem>>, vector<1x8x32xf32>
    %174 = vector.shape_cast %173 : vector<1x8x32xf32> to vector<8x32xf32>
    %175 = vector.shape_cast %171 : vector<8x32xf32> to vector<1x8x32xf32>
    tpu.vector_store %arg5[%172, %c0_61, %c0_62], %175 {strides = array<i32>} : memref<8x8x32xf32, #tpu.memory_space<vmem>>, vector<1x8x32xf32>,
    %c6_i32 = arith.constant 6 : i32
    %176 = arith.index_cast %c6_i32 : i32 to index
    %c0_63 = arith.constant 0 : index
    %c0_64 = arith.constant 0 : index
    %177 = vector.load %arg9[%176, %c0_63, %c0_64] : memref<8x8x128xf32, #tpu.memory_space<vmem>>, vector<1x8x128xf32>
    %178 = vector.shape_cast %177 : vector<1x8x128xf32> to vector<8x128xf32>
    %c0_65 = arith.constant 0 : index
    %c0_66 = arith.constant 0 : index
    %179 = vector.load %arg3[%c0_65, %c0_66] : memref<32x128xf32, #tpu.memory_space<vmem>>, vector<32x128xf32>
    %cst_67 = arith.constant dense<0.000000e+00> : vector<8x128xf32>
    %180 = tpu.matmul %171, %179, %cst_67 {dimension_numbers = #tpu.dot_dimension_numbers<[1], [0], [0], [1], [0, 0, 1, 1], [], []>} : vector<8x32xf32>, vector<32x128xf32>, vector<8x128xf32> -> vector<8x128xf32>
    %181 = arith.addf %178, %180 : vector<8x128xf32>
    %182 = math.tanh %181 : vector<8x128xf32>
    %183 = arith.negf %181 : vector<8x128xf32>
    %184 = math.exp %183 : vector<8x128xf32>
    %cst_68 = arith.constant 1.000000e+00 : f32
    %185 = vector.broadcast %cst_68 : f32 to vector<8x128xf32>
    %186 = arith.addf %185, %184 : vector<8x128xf32>
    %187 = arith.divf %185, %186 : vector<8x128xf32>
    %188 = arith.select %17, %182, %187 : vector<8x128xi1>, vector<8x128xf32>
    %189 = vector.extract_strided_slice %188 {offsets = [0, 0], sizes = [8, 32], strides = [1, 1]} : vector<8x128xf32> to vector<8x32xf32>
    %190 = vector.extract_strided_slice %188 {offsets = [0, 32], sizes = [8, 32], strides = [1, 1]} : vector<8x128xf32> to vector<8x32xf32>
    %191 = vector.extract_strided_slice %188 {offsets = [0, 64], sizes = [8, 32], strides = [1, 1]} : vector<8x128xf32> to vector<8x32xf32>
    %192 = vector.extract_strided_slice %188 {offsets = [0, 96], sizes = [8, 32], strides = [1, 1]} : vector<8x128xf32> to vector<8x32xf32>
    %193 = arith.mulf %190, %169 : vector<8x32xf32>
    %194 = arith.mulf %189, %191 : vector<8x32xf32>
    %195 = arith.addf %193, %194 : vector<8x32xf32>
    %196 = math.tanh %195 : vector<8x32xf32>
    %197 = arith.mulf %192, %196 : vector<8x32xf32>
    %198 = arith.index_cast %c6_i32 : i32 to index
    %c0_69 = arith.constant 0 : index
    %c0_70 = arith.constant 0 : index
    %199 = vector.load %arg5[%198, %c0_69, %c0_70] : memref<8x8x32xf32, #tpu.memory_space<vmem>>, vector<1x8x32xf32>
    %200 = vector.shape_cast %199 : vector<1x8x32xf32> to vector<8x32xf32>
    %201 = vector.shape_cast %197 : vector<8x32xf32> to vector<1x8x32xf32>
    tpu.vector_store %arg5[%198, %c0_69, %c0_70], %201 {strides = array<i32>} : memref<8x8x32xf32, #tpu.memory_space<vmem>>, vector<1x8x32xf32>,
    %c7_i32 = arith.constant 7 : i32
    %202 = arith.index_cast %c7_i32 : i32 to index
    %c0_71 = arith.constant 0 : index
    %c0_72 = arith.constant 0 : index
    %203 = vector.load %arg9[%202, %c0_71, %c0_72] : memref<8x8x128xf32, #tpu.memory_space<vmem>>, vector<1x8x128xf32>
    %204 = vector.shape_cast %203 : vector<1x8x128xf32> to vector<8x128xf32>
    %c0_73 = arith.constant 0 : index
    %c0_74 = arith.constant 0 : index
    %205 = vector.load %arg3[%c0_73, %c0_74] : memref<32x128xf32, #tpu.memory_space<vmem>>, vector<32x128xf32>
    %cst_75 = arith.constant dense<0.000000e+00> : vector<8x128xf32>
    %206 = tpu.matmul %197, %205, %cst_75 {dimension_numbers = #tpu.dot_dimension_numbers<[1], [0], [0], [1], [0, 0, 1, 1], [], []>} : vector<8x32xf32>, vector<32x128xf32>, vector<8x128xf32> -> vector<8x128xf32>
    %207 = arith.addf %204, %206 : vector<8x128xf32>
    %208 = math.tanh %207 : vector<8x128xf32>
    %209 = arith.negf %207 : vector<8x128xf32>
    %210 = math.exp %209 : vector<8x128xf32>
    %cst_76 = arith.constant 1.000000e+00 : f32
    %211 = vector.broadcast %cst_76 : f32 to vector<8x128xf32>
    %212 = arith.addf %211, %210 : vector<8x128xf32>
    %213 = arith.divf %211, %212 : vector<8x128xf32>
    %214 = arith.select %17, %208, %213 : vector<8x128xi1>, vector<8x128xf32>
    %215 = vector.extract_strided_slice %214 {offsets = [0, 0], sizes = [8, 32], strides = [1, 1]} : vector<8x128xf32> to vector<8x32xf32>
    %216 = vector.extract_strided_slice %214 {offsets = [0, 32], sizes = [8, 32], strides = [1, 1]} : vector<8x128xf32> to vector<8x32xf32>
    %217 = vector.extract_strided_slice %214 {offsets = [0, 64], sizes = [8, 32], strides = [1, 1]} : vector<8x128xf32> to vector<8x32xf32>
    %218 = vector.extract_strided_slice %214 {offsets = [0, 96], sizes = [8, 32], strides = [1, 1]} : vector<8x128xf32> to vector<8x32xf32>
    %219 = arith.mulf %216, %195 : vector<8x32xf32>
    %220 = arith.mulf %215, %217 : vector<8x32xf32>
    %221 = arith.addf %219, %220 : vector<8x32xf32>
    %222 = math.tanh %221 : vector<8x32xf32>
    %223 = arith.mulf %218, %222 : vector<8x32xf32>
    %224 = arith.index_cast %c7_i32 : i32 to index
    %c0_77 = arith.constant 0 : index
    %c0_78 = arith.constant 0 : index
    %225 = vector.load %arg5[%224, %c0_77, %c0_78] : memref<8x8x32xf32, #tpu.memory_space<vmem>>, vector<1x8x32xf32>
    %226 = vector.shape_cast %225 : vector<1x8x32xf32> to vector<8x32xf32>
    %227 = vector.shape_cast %223 : vector<8x32xf32> to vector<1x8x32xf32>
    tpu.vector_store %arg5[%224, %c0_77, %c0_78], %227 {strides = array<i32>} : memref<8x8x32xf32, #tpu.memory_space<vmem>>, vector<1x8x32xf32>,
    %c8_i32 = arith.constant 8 : i32
    %c0_79 = arith.constant 0 : index
    %c0_80 = arith.constant 0 : index
    %228 = vector.load %arg7[%c0_79, %c0_80] : memref<8x32xf32, #tpu.memory_space<vmem>>, vector<8x32xf32>
    tpu.vector_store %arg7[%c0_79, %c0_80], %223 {strides = array<i32>} : memref<8x32xf32, #tpu.memory_space<vmem>>, vector<8x32xf32>,
    %c0_81 = arith.constant 0 : index
    %c0_82 = arith.constant 0 : index
    %229 = vector.load %arg8[%c0_81, %c0_82] : memref<8x32xf32, #tpu.memory_space<vmem>>, vector<8x32xf32>
    tpu.vector_store %arg8[%c0_81, %c0_82], %221 {strides = array<i32>} : memref<8x32xf32, #tpu.memory_space<vmem>>, vector<8x32xf32>,
    %c0_i32_83 = arith.constant 0 : i32
    %230 = arith.cmpi eq, %arg0, %c0_i32_83 : i32
    %231 = arith.extui %230 : i1 to i32
    %c0_i32_84 = arith.constant 0 : i32
    %232 = arith.cmpi ne, %231, %c0_i32_84 : i32
    scf.if %232 {
      %c0_85 = arith.constant 0 : index
      %c0_86 = arith.constant 0 : index
      %233 = vector.load %arg6[%c0_85, %c0_86] : memref<8x32xf32, #tpu.memory_space<vmem>>, vector<8x32xf32>
      tpu.vector_store %arg6[%c0_85, %c0_86], %221 {strides = array<i32>} : memref<8x32xf32, #tpu.memory_space<vmem>>, vector<8x32xf32>,
    } else {
    }
    return
  }
  func.func @transform_0(%arg0: i32) -> (i32, i32, i32) {
    %c0_i32 = arith.constant 0 : i32
    %c0_i32_0 = arith.constant 0 : i32
    %c0_i32_1 = arith.constant 0 : i32
    return %arg0, %c0_i32, %c0_i32_0 : i32, i32, i32
  }
  func.func @transform_1(%arg0: i32) -> (i32, i32) {
    %c0_i32 = arith.constant 0 : i32
    %c0_i32_0 = arith.constant 0 : i32
    %c0_i32_1 = arith.constant 0 : i32
    return %c0_i32, %c0_i32_0 : i32, i32
  }
  func.func @transform_2(%arg0: i32) -> (i32, i32) {
    %c0_i32 = arith.constant 0 : i32
    %c0_i32_0 = arith.constant 0 : i32
    %c0_i32_1 = arith.constant 0 : i32
    return %c0_i32, %c0_i32_0 : i32, i32
  }
  func.func @transform_3(%arg0: i32) -> (i32, i32) {
    %c0_i32 = arith.constant 0 : i32
    %c0_i32_0 = arith.constant 0 : i32
    %c0_i32_1 = arith.constant 0 : i32
    return %c0_i32, %c0_i32_0 : i32, i32
  }
  func.func @transform_4(%arg0: i32) -> (i32, i32, i32) {
    %c0_i32 = arith.constant 0 : i32
    %c0_i32_0 = arith.constant 0 : i32
    %c0_i32_1 = arith.constant 0 : i32
    return %arg0, %c0_i32, %c0_i32_0 : i32, i32, i32
  }
  func.func @transform_5(%arg0: i32) -> (i32, i32) {
    %c0_i32 = arith.constant 0 : i32
    %c0_i32_0 = arith.constant 0 : i32
    %c0_i32_1 = arith.constant 0 : i32
    return %c0_i32, %c0_i32_0 : i32, i32
  }
}

</mosaic_0001>

<llo_original>
// kernel: _lambda_.1
$region0: #{_lambda_.1}
  #allocation0 [shape = 'u32[]', space=smem, size = 0x4, offset = 0x4, fixed_abs, tag = 'smem constant byte address 0x4 - core index']
  #allocation1 [shape = 'u32[144,128]{1,0:T(1,128)}', space=vmem, size = 0x12000, scoped, tag = 'internal scratch']
  #allocation2 [shape = 'f32[8,32]{1,0:T(8,128)}', space=vmem, size = 0x1000, scoped, tag = 'scratch operand']
  #allocation3 [shape = 'f32[8,32]{1,0:T(8,128)}', space=vmem, size = 0x1000, scoped, tag = 'scratch operand']
  #allocation4 [shape = 'f32[8,8,128]{2,1,0:T(8,128)}', space=vmem, size = 0x8000, scoped, tag = 'scratch operand']
  %s0 = inlined_call_operand.vmem [shape: f32[8,8,32], index: 0, kind: input, shape index: {}]
  %s1 = inlined_call_operand.vmem [shape: f32[32,128], index: 1, kind: input, shape index: {}]
  %s2 = inlined_call_operand.vmem [shape: f32[32,128], index: 2, kind: input, shape index: {}]
  %s3 = inlined_call_operand.vmem [shape: f32[1,128], index: 3, kind: input, shape index: {}]
  %s4 = inlined_call_operand.vmem [shape: f32[8,8,32], index: 4, kind: output, shape index: {0}]
  %s5 = inlined_call_operand.hbm [shape: f32[8,32], index: 5, kind: output, shape index: {1}]
  %6 = xla_tuple %s4, %s5
  %s7 = sld [smem:[#allocation0]]
  $region42: #{_lambda_.1} parent=0
    _
  %s9 = ssub.s32 1, %s7
  %s10 = scalar_select 0, %s9, %s7
  $region1: #{_lambda_.1} parent=0
    #allocation5 [shape = 'u8[4096]{0}', space=vmem, size = 0x1000, scoped, tag = 'output window, operand 1, single buffered']
    #allocation6 [shape = 's32[1]{0}', space=sflag, size = 0x4, scoped, tag = 'scoped memory for _lambda_.1']
    %11 = vsyncpa [#allocation6], 0
    // Predicated region
    $region2: #{_lambda_.1} parent=1 // pred_check
      _
    $region3: #{_lambda_.1} parent=1 // pred_check_branch
      %13 = sbr.rel (0) target = $region5
    $region4: #{_lambda_.1} parent=1 // pred_region
      _
    $region5: #{_lambda_.1} parent=1 // pred_fallthru
      _
    // Predicated region
    $region6: #{_lambda_.1} parent=1 // pred_check
      _
    $region7: #{_lambda_.1} parent=1 // pred_check_branch
      %15 = sbr.rel (0) target = $region9
    $region8: #{_lambda_.1} parent=1 // pred_region
      _
    $region9: #{_lambda_.1} parent=1 // pred_fallthru
      _
    // Predicated region
    $region10: #{_lambda_.1} parent=1 // pred_check
      _
    $region11: #{_lambda_.1} parent=1 // pred_check_branch
      %17 = sbr.rel (0) target = $region13
    $region12: #{_lambda_.1} parent=1 // pred_region
      _
    $region13: #{_lambda_.1} parent=1 // pred_fallthru
      _
    // Predicated region
    $region14: #{_lambda_.1} parent=1 // pred_check
      _
    $region15: #{_lambda_.1} parent=1 // pred_check_branch
      %19 = sbr.rel (0) target = $region17
    $region16: #{_lambda_.1} parent=1 // pred_region
      _
    $region17: #{_lambda_.1} parent=1 // pred_fallthru
      _
    %p20 = scmp.eq.s32.totalorder 0, 0
    // Predicated region
    $region18: #{_lambda_.1} parent=1 // pred_check
      %p21 = pneg %p20
    $region19: #{_lambda_.1} parent=1 // pred_check_branch
      %23 = sbr.rel (%p21) target = $region21
    $region20: #{_lambda_.1} parent=1 // pred_region
      %vm24 = vcmask 261120
      %25 = vst.msk [vmem:[#allocation2] sm:$0xff] %vm24, 0.0
      %26 = vst.msk [vmem:[#allocation3] sm:$0xff] %vm24, 0.0
    $region21: #{_lambda_.1} parent=1 // pred_fallthru
      _
    %v27 = vld [vmem:[%s0] sm:$0xff]
    %v28 = vld [vmem:[%s0 + $0x8] sm:$0xff]
    %v29 = vld [vmem:[%s0 + $0x10] sm:$0xff]
    %v30 = vld [vmem:[%s0 + $0x18] sm:$0xff]
    %v31 = vld [vmem:[%s0 + $0x20] sm:$0xff]
    %v32 = vld [vmem:[%s0 + $0x28] sm:$0xff]
    %v33 = vld [vmem:[%s0 + $0x30] sm:$0xff]
    %v34 = vld [vmem:[%s0 + $0x38] sm:$0xff]
    %v35 = vld [vmem:[%s1] sm:$0xff]
    %v36 = vld [vmem:[%s1 + $0x8] sm:$0xff]
    %v37 = vld [vmem:[%s1 + $0x10] sm:$0xff]
    %v38 = vld [vmem:[%s1 + $0x18] sm:$0xff]
    %v39 = vld [vmem:[%s3] sm:$0x1]
    %v41 = vlaneseq
    %v42 = vshrl.u32 %v41, 7
    %v43 = vsub.s32 0, %v42
    %v44 = vrot.slane %v39, %v43
    %vm46 = vcmask 261120
    %v48 = vsel %vm46, %v27, 0
    %v51 = vsel %vm46, %v28, 0
    %v54 = vsel %vm46, %v29, 0
    %v57 = vsel %vm46, %v30, 0
    %v60 = vsel %vm46, %v31, 0
    %v63 = vsel %vm46, %v32, 0
    %v66 = vsel %vm46, %v33, 0
    %v69 = vsel %vm46, %v34, 0
    %71 = vmatprep.subr.mxu0 0.0
    %72 = vmatpush1.msra.mxu0 %v35
    %73 = vmatprep.subr.mxu0 0.0
    %74 = vmatpush1.msra.mxu0 %v36
    %75 = vmatprep.subr.mxu0 0.0
    %76 = vmatpush1.msra.mxu0 %v37
    %77 = vmatprep.subr.mxu0 0.0
    %78 = vmatpush1.msra.mxu0 %v38
    %79 = vmatprep.subr.mxu0 0.0
    %80 = vmatpush1.msra.mxu0 0.0
    %81 = vmatprep.subr.mxu0 0.0
    %82 = vmatpush1.msra.mxu0 0.0
    %83 = vmatprep.subr.mxu0 0.0
    %84 = vmatpush1.msra.mxu0 0.0
    %85 = vmatprep.subr.mxu0 0.0
    %86 = vmatpush1.msra.mxu0 0.0
    %87 = vmatprep.subr.mxu0 0.0
    %88 = vmatpush1.msra.mxu0 0.0
    %89 = vmatprep.subr.mxu0 0.0
    %90 = vmatpush1.msra.mxu0 0.0
    %91 = vmatprep.subr.mxu0 0.0
    %92 = vmatpush1.msra.mxu0 0.0
    %93 = vmatprep.subr.mxu0 0.0
    %94 = vmatpush1.msra.mxu0 0.0
    %95 = vmatprep.subr.mxu0 0.0
    %96 = vmatpush1.msra.mxu0 0.0
    %97 = vmatprep.subr.mxu0 0.0
    %98 = vmatpush1.msra.mxu0 0.0
    %99 = vmatprep.subr.mxu0 0.0
    %100 = vmatpush1.msra.mxu0 0.0
    %101 = vmatprep.subr.mxu0 0.0
    %102 = vmatpush1.msra.mxu0 0.0
    %103 = vmatprep.subr.mxu0 0.0
    %104 = vmatpush1.msra.mxu0 0.0
    %105 = vmatprep.subr.mxu0 0.0
    %106 = vmatpush1.msra.mxu0 0.0
    %107 = vmatprep.subr.mxu0 0.0
    %108 = vmatpush1.msra.mxu0 0.0
    %109 = vmatprep.subr.mxu0 0.0
    %110 = vmatpush1.msra.mxu0 0.0
    %111 = vmatprep.subr.mxu0 0.0
    %112 = vmatpush1.msra.mxu0 0.0
    %113 = vmatprep.subr.mxu0 0.0
    %114 = vmatpush1.msra.mxu0 0.0
    %115 = vmatprep.subr.mxu0 0.0
    %116 = vmatpush1.msra.mxu0 0.0
    %117 = vmatprep.subr.mxu0 0.0
    %118 = vmatpush1.msra.mxu0 0.0
    %119 = vmatprep.subr.mxu0 0.0
    %120 = vmatpush1.msra.mxu0 0.0
    %121 = vmatprep.subr.mxu0 0.0
    %122 = vmatpush1.msra.mxu0 0.0
    %123 = vmatprep.subr.mxu0 0.0
    %124 = vmatpush1.msra.mxu0 0.0
    %125 = vmatprep.subr.mxu0 0.0
    %126 = vmatpush1.msra.mxu0 0.0
    %127 = vmatprep.subr.mxu0 0.0
    %128 = vmatpush1.msra.mxu0 0.0
    %129 = vmatprep.subr.mxu0 0.0
    %130 = vmatpush1.msra.mxu0 0.0
    %131 = vmatprep.subr.mxu0 0.0
    %132 = vmatpush1.msra.mxu0 0.0
    %133 = vmatprep.subr.mxu0 0.0
    %134 = vmatpush1.msra.mxu0 0.0
    %135 = vmatprep.mubr.f32.mxu0 0.0
    %136 = vmatmul.mubr.f32.gmra.mrb[0].mxu0 %v48
    %v137 = vpop.f32.mrb[0].mxu0
    %v138 = vadd.f32 %v44, %v137
    %v139 = vpop.f32.mrb[0].mxu0
    %140 = vmatprep.mubr.f32.mxu0 0.0
    %141 = vmatmul.mubr.f32.gmra.mrb[0].mxu0 %v51
    %v142 = vpop.f32.mrb[0].mxu0
    %v143 = vadd.f32 %v44, %v142
    %v144 = vpop.f32.mrb[0].mxu0
    %145 = vmatprep.mubr.f32.mxu0 0.0
    %146 = vmatmul.mubr.f32.gmra.mrb[0].mxu0 %v54
    %v147 = vpop.f32.mrb[0].mxu0
    %v148 = vadd.f32 %v44, %v147
    %v149 = vpop.f32.mrb[0].mxu0
    %150 = vmatprep.mubr.f32.mxu0 0.0
    %151 = vmatmul.mubr.f32.gmra.mrb[0].mxu0 %v57
    %v152 = vpop.f32.mrb[0].mxu0
    %v153 = vadd.f32 %v44, %v152
    %v154 = vpop.f32.mrb[0].mxu0
    %155 = vmatprep.mubr.f32.mxu0 0.0
    %156 = vmatmul.mubr.f32.gmra.mrb[0].mxu0 %v60
    %v157 = vpop.f32.mrb[0].mxu0
    %v158 = vadd.f32 %v44, %v157
    %v159 = vpop.f32.mrb[0].mxu0
    %160 = vmatprep.mubr.f32.mxu0 0.0
    %161 = vmatmul.mubr.f32.gmra.mrb[0].mxu0 %v63
    %v162 = vpop.f32.mrb[0].mxu0
    %v163 = vadd.f32 %v44, %v162
    %v164 = vpop.f32.mrb[0].mxu0
    %165 = vmatprep.mubr.f32.mxu0 0.0
    %166 = vmatmul.mubr.f32.gmra.mrb[0].mxu0 %v66
    %v167 = vpop.f32.mrb[0].mxu0
    %v168 = vadd.f32 %v44, %v167
    %v169 = vpop.f32.mrb[0].mxu0
    %170 = vmatprep.mubr.f32.mxu0 0.0
    %171 = vmatmul.mubr.f32.gmra.mrb[0].mxu0 %v69
    %v172 = vpop.f32.mrb[0].mxu0
    %v173 = vadd.f32 %v44, %v172
    %v174 = vpop.f32.mrb[0].mxu0
    %175 = vdwg.mxu0
    %176 = vst [vmem:[#allocation4] sm:$0xff] %v138
    %177 = vst [vmem:[#allocation4 + $0x8] sm:$0xff] %v143
    %178 = vst [vmem:[#allocation4 + $0x10] sm:$0xff] %v148
    %179 = vst [vmem:[#allocation4 + $0x18] sm:$0xff] %v153
    %180 = vst [vmem:[#allocation4 + $0x20] sm:$0xff] %v158
    %181 = vst [vmem:[#allocation4 + $0x28] sm:$0xff] %v163
    %182 = vst [vmem:[#allocation4 + $0x30] sm:$0xff] %v168
    %183 = vst [vmem:[#allocation4 + $0x38] sm:$0xff] %v173
    %v184 = vlaneseq
    %v185 = vand.u32 %v184, 127
    %vm186 = vcmp.ge.s32.totalorder %v185, 64
    %vm187 = vcmp.lt.s32.totalorder %v185, 96
    %vm188 = vmand %vm186, %vm187
    %v189 = vld [vmem:[#allocation2] sm:$0xff]
    %v190 = vld [vmem:[#allocation3] sm:$0xff]
    %v191 = vld [vmem:[#allocation4] sm:$0xff]
    %v192 = vld [vmem:[%s2] sm:$0xff]
    %v193 = vld [vmem:[%s2 + $0x8] sm:$0xff]
    %v194 = vld [vmem:[%s2 + $0x10] sm:$0xff]
    %v195 = vld [vmem:[%s2 + $0x18] sm:$0xff]
    %v197 = vsel %vm46, %v189, 0
    %199 = vmatprep.subr.mxu0 0.0
    %200 = vmatpush1.msra.mxu0 %v192
    %201 = vmatprep.subr.mxu0 0.0
    %202 = vmatpush1.msra.mxu0 %v193
    %203 = vmatprep.subr.mxu0 0.0
    %204 = vmatpush1.msra.mxu0 %v194
    %205 = vmatprep.subr.mxu0 0.0
    %206 = vmatpush1.msra.mxu0 %v195
    %207 = vmatprep.subr.mxu0 0.0
    %208 = vmatpush1.msra.mxu0 0.0
    %209 = vmatprep.subr.mxu0 0.0
    %210 = vmatpush1.msra.mxu0 0.0
    %211 = vmatprep.subr.mxu0 0.0
    %212 = vmatpush1.msra.mxu0 0.0
    %213 = vmatprep.subr.mxu0 0.0
    %214 = vmatpush1.msra.mxu0 0.0
    %215 = vmatprep.subr.mxu0 0.0
    %216 = vmatpush1.msra.mxu0 0.0
    %217 = vmatprep.subr.mxu0 0.0
    %218 = vmatpush1.msra.mxu0 0.0
    %219 = vmatprep.subr.mxu0 0.0
    %220 = vmatpush1.msra.mxu0 0.0
    %221 = vmatprep.subr.mxu0 0.0
    %222 = vmatpush1.msra.mxu0 0.0
    %223 = vmatprep.subr.mxu0 0.0
    %224 = vmatpush1.msra.mxu0 0.0
    %225 = vmatprep.subr.mxu0 0.0
    %226 = vmatpush1.msra.mxu0 0.0
    %227 = vmatprep.subr.mxu0 0.0
    %228 = vmatpush1.msra.mxu0 0.0
    %229 = vmatprep.subr.mxu0 0.0
    %230 = vmatpush1.msra.mxu0 0.0
    %231 = vmatprep.subr.mxu0 0.0
    %232 = vmatpush1.msra.mxu0 0.0
    %233 = vmatprep.subr.mxu0 0.0
    %234 = vmatpush1.msra.mxu0 0.0
    %235 = vmatprep.subr.mxu0 0.0
    %236 = vmatpush1.msra.mxu0 0.0
    %237 = vmatprep.subr.mxu0 0.0
    %238 = vmatpush1.msra.mxu0 0.0
    %239 = vmatprep.subr.mxu0 0.0
    %240 = vmatpush1.msra.mxu0 0.0
    %241 = vmatprep.subr.mxu0 0.0
    %242 = vmatpush1.msra.mxu0 0.0
    %243 = vmatprep.subr.mxu0 0.0
    %244 = vmatpush1.msra.mxu0 0.0
    %245 = vmatprep.subr.mxu0 0.0
    %246 = vmatpush1.msra.mxu0 0.0
    %247 = vmatprep.subr.mxu0 0.0
    %248 = vmatpush1.msra.mxu0 0.0
    %249 = vmatprep.subr.mxu0 0.0
    %250 = vmatpush1.msra.mxu0 0.0
    %251 = vmatprep.subr.mxu0 0.0
    %252 = vmatpush1.msra.mxu0 0.0
    %253 = vmatprep.subr.mxu0 0.0
    %254 = vmatpush1.msra.mxu0 0.0
    %255 = vmatprep.subr.mxu0 0.0
    %256 = vmatpush1.msra.mxu0 0.0
    %257 = vmatprep.subr.mxu0 0.0
    %258 = vmatpush1.msra.mxu0 0.0
    %259 = vmatprep.subr.mxu0 0.0
    %260 = vmatpush1.msra.mxu0 0.0
    %261 = vmatprep.subr.mxu0 0.0
    %262 = vmatpush1.msra.mxu0 0.0
    %263 = vmatprep.mubr.f32.mxu0 0.0
    %264 = vmatmul.mubr.f32.gmra.mrb[0].mxu0 %v197
    %v265 = vpop.f32.mrb[0].mxu0
    %v266 = vadd.f32 0.0, %v265
    %v267 = vpop.f32.mrb[0].mxu0
    %268 = vdwg.mxu0
    %v269 = vadd.f32 %v191, %v266
    %v270 = vtanh.pop %v269
    %v271 = vxor.u32 %v269, 2147483648
    %v272 = vmul.f32 %v271, 1.442695
    %v273 = vpow.pop %v272
    %v274 = vadd.f32 %v273, 1.0
    %v275 = vrcp.pop %v274
    %v276 = vmul.f32 1.0, %v275
    %v277 = vsel %vm188, %v270, %v276
    %279 = vrot.lane.b32.xlu0 %v190, 32
    %v280 = vpop.permute.xlu0 %279
    %v282 = vmul.f32 %v277, %v280
    %284 = vrot.lane.b32.xlu0 %v277, 64
    %v285 = vpop.permute.xlu0 %284
    %v287 = vmul.f32 %v277, %v285
    %289 = vrot.lane.b32.xlu0 %v287, 32
    %v290 = vpop.permute.xlu0 %289
    %v292 = vadd.f32 %v282, %v290
    %v293 = vtanh.pop %v292
    %295 = vrot.lane.b32.xlu0 %v293, 64
    %v296 = vpop.permute.xlu0 %295
    %v298 = vmul.f32 %v277, %v296
    %300 = vrot.lane.b32.xlu0 %v298, 32
    %v301 = vpop.permute.xlu0 %300
    %303 = vst.msk [vmem:[%s4] sm:$0xff] %vm46, %v301
    %s304 = scalar_lea.vmem [#allocation4], 8
    %v305 = vld [vmem:[%s304] sm:$0xff]
    %v306 = vld [vmem:[%s2] sm:$0xff]
    %v307 = vld [vmem:[%s2 + $0x8] sm:$0xff]
    %v308 = vld [vmem:[%s2 + $0x10] sm:$0xff]
    %v309 = vld [vmem:[%s2 + $0x18] sm:$0xff]
    %v310 = vsel %vm46, %v301, 0
    %312 = vmatprep.subr.mxu0 0.0
    %313 = vmatpush1.msra.mxu0 %v306
    %314 = vmatprep.subr.mxu0 0.0
    %315 = vmatpush1.msra.mxu0 %v307
    %316 = vmatprep.subr.mxu0 0.0
    %317 = vmatpush1.msra.mxu0 %v308
    %318 = vmatprep.subr.mxu0 0.0
    %319 = vmatpush1.msra.mxu0 %v309
    %320 = vmatprep.subr.mxu0 0.0
    %321 = vmatpush1.msra.mxu0 0.0
    %322 = vmatprep.subr.mxu0 0.0
    %323 = vmatpush1.msra.mxu0 0.0
    %324 = vmatprep.subr.mxu0 0.0
    %325 = vmatpush1.msra.mxu0 0.0
    %326 = vmatprep.subr.mxu0 0.0
    %327 = vmatpush1.msra.mxu0 0.0
    %328 = vmatprep.subr.mxu0 0.0
    %329 = vmatpush1.msra.mxu0 0.0
    %330 = vmatprep.subr.mxu0 0.0
    %331 = vmatpush1.msra.mxu0 0.0
    %332 = vmatprep.subr.mxu0 0.0
    %333 = vmatpush1.msra.mxu0 0.0
    %334 = vmatprep.subr.mxu0 0.0
    %335 = vmatpush1.msra.mxu0 0.0
    %336 = vmatprep.subr.mxu0 0.0
    %337 = vmatpush1.msra.mxu0 0.0
    %338 = vmatprep.subr.mxu0 0.0
    %339 = vmatpush1.msra.mxu0 0.0
    %340 = vmatprep.subr.mxu0 0.0
    %341 = vmatpush1.msra.mxu0 0.0
    %342 = vmatprep.subr.mxu0 0.0
    %343 = vmatpush1.msra.mxu0 0.0
    %344 = vmatprep.subr.mxu0 0.0
    %345 = vmatpush1.msra.mxu0 0.0
    %346 = vmatprep.subr.mxu0 0.0
    %347 = vmatpush1.msra.mxu0 0.0
    %348 = vmatprep.subr.mxu0 0.0
    %349 = vmatpush1.msra.mxu0 0.0
    %350 = vmatprep.subr.mxu0 0.0
    %351 = vmatpush1.msra.mxu0 0.0
    %352 = vmatprep.subr.mxu0 0.0
    %353 = vmatpush1.msra.mxu0 0.0
    %354 = vmatprep.subr.mxu0 0.0
    %355 = vmatpush1.msra.mxu0 0.0
    %356 = vmatprep.subr.mxu0 0.0
    %357 = vmatpush1.msra.mxu0 0.0
    %358 = vmatprep.subr.mxu0 0.0
    %359 = vmatpush1.msra.mxu0 0.0
    %360 = vmatprep.subr.mxu0 0.0
    %361 = vmatpush1.msra.mxu0 0.0
    %362 = vmatprep.subr.mxu0 0.0
    %363 = vmatpush1.msra.mxu0 0.0
    %364 = vmatprep.subr.mxu0 0.0
    %365 = vmatpush1.msra.mxu0 0.0
    %366 = vmatprep.subr.mxu0 0.0
    %367 = vmatpush1.msra.mxu0 0.0
    %368 = vmatprep.subr.mxu0 0.0
    %369 = vmatpush1.msra.mxu0 0.0
    %370 = vmatprep.subr.mxu0 0.0
    %371 = vmatpush1.msra.mxu0 0.0
    %372 = vmatprep.subr.mxu0 0.0
    %373 = vmatpush1.msra.mxu0 0.0
    %374 = vmatprep.subr.mxu0 0.0
    %375 = vmatpush1.msra.mxu0 0.0
    %376 = vmatprep.mubr.f32.mxu0 0.0
    %377 = vmatmul.mubr.f32.gmra.mrb[0].mxu0 %v310
    %v378 = vpop.f32.mrb[0].mxu0
    %v379 = vadd.f32 0.0, %v378
    %v380 = vpop.f32.mrb[0].mxu0
    %381 = vdwg.mxu0
    %v382 = vadd.f32 %v305, %v379
    %v383 = vtanh.pop %v382
    %v384 = vxor.u32 %v382, 2147483648
    %v385 = vmul.f32 %v384, 1.442695
    %v386 = vpow.pop %v385
    %v387 = vadd.f32 %v386, 1.0
    %v388 = vrcp.pop %v387
    %v389 = vmul.f32 1.0, %v388
    %v390 = vsel %vm188, %v383, %v389
    %v391 = vmul.f32 %v390, %v292
    %393 = vrot.lane.b32.xlu0 %v390, 64
    %v394 = vpop.permute.xlu0 %393
    %v396 = vmul.f32 %v390, %v394
    %398 = vrot.lane.b32.xlu0 %v396, 32
    %v399 = vpop.permute.xlu0 %398
    %v401 = vadd.f32 %v391, %v399
    %v402 = vtanh.pop %v401
    %404 = vrot.lane.b32.xlu0 %v402, 64
    %v405 = vpop.permute.xlu0 %404
    %v407 = vmul.f32 %v390, %v405
    %409 = vrot.lane.b32.xlu0 %v407, 32
    %v410 = vpop.permute.xlu0 %409
    %s412 = scalar_lea.vmem %s4, 8
    %413 = vst.msk [vmem:[%s412] sm:$0xff] %vm46, %v410
    %s414 = scalar_lea.vmem [#allocation4], 16
    %v415 = vld [vmem:[%s414] sm:$0xff]
    %v416 = vld [vmem:[%s2] sm:$0xff]
    %v417 = vld [vmem:[%s2 + $0x8] sm:$0xff]
    %v418 = vld [vmem:[%s2 + $0x10] sm:$0xff]
    %v419 = vld [vmem:[%s2 + $0x18] sm:$0xff]
    %v420 = vsel %vm46, %v410, 0
    %422 = vmatprep.subr.mxu0 0.0
    %423 = vmatpush1.msra.mxu0 %v416
    %424 = vmatprep.subr.mxu0 0.0
    %425 = vmatpush1.msra.mxu0 %v417
    %426 = vmatprep.subr.mxu0 0.0
    %427 = vmatpush1.msra.mxu0 %v418
    %428 = vmatprep.subr.mxu0 0.0
    %429 = vmatpush1.msra.mxu0 %v419
    %430 = vmatprep.subr.mxu0 0.0
    %431 = vmatpush1.msra.mxu0 0.0
    %432 = vmatprep.subr.mxu0 0.0
    %433 = vmatpush1.msra.mxu0 0.0
    %434 = vmatprep.subr.mxu0 0.0
    %435 = vmatpush1.msra.mxu0 0.0
    %436 = vmatprep.subr.mxu0 0.0
    %437 = vmatpush1.msra.mxu0 0.0
    %438 = vmatprep.subr.mxu0 0.0
    %439 = vmatpush1.msra.mxu0 0.0
    %440 = vmatprep.subr.mxu0 0.0
    %441 = vmatpush1.msra.mxu0 0.0
    %442 = vmatprep.subr.mxu0 0.0
    %443 = vmatpush1.msra.mxu0 0.0
    %444 = vmatprep.subr.mxu0 0.0
    %445 = vmatpush1.msra.mxu0 0.0
    %446 = vmatprep.subr.mxu0 0.0
    %447 = vmatpush1.msra.mxu0 0.0
    %448 = vmatprep.subr.mxu0 0.0
    %449 = vmatpush1.msra.mxu0 0.0
    %450 = vmatprep.subr.mxu0 0.0
    %451 = vmatpush1.msra.mxu0 0.0
    %452 = vmatprep.subr.mxu0 0.0
    %453 = vmatpush1.msra.mxu0 0.0
    %454 = vmatprep.subr.mxu0 0.0
    %455 = vmatpush1.msra.mxu0 0.0
    %456 = vmatprep.subr.mxu0 0.0
    %457 = vmatpush1.msra.mxu0 0.0
    %458 = vmatprep.subr.mxu0 0.0
    %459 = vmatpush1.msra.mxu0 0.0
    %460 = vmatprep.subr.mxu0 0.0
    %461 = vmatpush1.msra.mxu0 0.0
    %462 = vmatprep.subr.mxu0 0.0
    %463 = vmatpush1.msra.mxu0 0.0
    %464 = vmatprep.subr.mxu0 0.0
    %465 = vmatpush1.msra.mxu0 0.0
    %466 = vmatprep.subr.mxu0 0.0
    %467 = vmatpush1.msra.mxu0 0.0
    %468 = vmatprep.subr.mxu0 0.0
    %469 = vmatpush1.msra.mxu0 0.0
    %470 = vmatprep.subr.mxu0 0.0
    %471 = vmatpush1.msra.mxu0 0.0
    %472 = vmatprep.subr.mxu0 0.0
    %473 = vmatpush1.msra.mxu0 0.0
    %474 = vmatprep.subr.mxu0 0.0
    %475 = vmatpush1.msra.mxu0 0.0
    %476 = vmatprep.subr.mxu0 0.0
    %477 = vmatpush1.msra.mxu0 0.0
    %478 = vmatprep.subr.mxu0 0.0
    %479 = vmatpush1.msra.mxu0 0.0
    %480 = vmatprep.subr.mxu0 0.0
    %481 = vmatpush1.msra.mxu0 0.0
    %482 = vmatprep.subr.mxu0 0.0
    %483 = vmatpush1.msra.mxu0 0.0
    %484 = vmatprep.subr.mxu0 0.0
    %485 = vmatpush1.msra.mxu0 0.0
    %486 = vmatprep.mubr.f32.mxu0 0.0
    %487 = vmatmul.mubr.f32.gmra.mrb[0].mxu0 %v420
    %v488 = vpop.f32.mrb[0].mxu0
    %v489 = vadd.f32 0.0, %v488
    %v490 = vpop.f32.mrb[0].mxu0
    %491 = vdwg.mxu0
    %v492 = vadd.f32 %v415, %v489
    %v493 = vtanh.pop %v492
    %v494 = vxor.u32 %v492, 2147483648
    %v495 = vmul.f32 %v494, 1.442695
    %v496 = vpow.pop %v495
    %v497 = vadd.f32 %v496, 1.0
    %v498 = vrcp.pop %v497
    %v499 = vmul.f32 1.0, %v498
    %v500 = vsel %vm188, %v493, %v499
    %v501 = vmul.f32 %v500, %v401
    %503 = vrot.lane.b32.xlu0 %v500, 64
    %v504 = vpop.permute.xlu0 %503
    %v506 = vmul.f32 %v500, %v504
    %508 = vrot.lane.b32.xlu0 %v506, 32
    %v509 = vpop.permute.xlu0 %508
    %v511 = vadd.f32 %v501, %v509
    %v512 = vtanh.pop %v511
    %514 = vrot.lane.b32.xlu0 %v512, 64
    %v515 = vpop.permute.xlu0 %514
    %v517 = vmul.f32 %v500, %v515
    %519 = vrot.lane.b32.xlu0 %v517, 32
    %v520 = vpop.permute.xlu0 %519
    %s522 = scalar_lea.vmem %s4, 16
    %523 = vst.msk [vmem:[%s522] sm:$0xff] %vm46, %v520
    %s524 = scalar_lea.vmem [#allocation4], 24
    %v525 = vld [vmem:[%s524] sm:$0xff]
    %v526 = vld [vmem:[%s2] sm:$0xff]
    %v527 = vld [vmem:[%s2 + $0x8] sm:$0xff]
    %v528 = vld [vmem:[%s2 + $0x10] sm:$0xff]
    %v529 = vld [vmem:[%s2 + $0x18] sm:$0xff]
    %v530 = vsel %vm46, %v520, 0
    %532 = vmatprep.subr.mxu0 0.0
    %533 = vmatpush1.msra.mxu0 %v526
    %534 = vmatprep.subr.mxu0 0.0
    %535 = vmatpush1.msra.mxu0 %v527
    %536 = vmatprep.subr.mxu0 0.0
    %537 = vmatpush1.msra.mxu0 %v528
    %538 = vmatprep.subr.mxu0 0.0
    %539 = vmatpush1.msra.mxu0 %v529
    %540 = vmatprep.subr.mxu0 0.0
    %541 = vmatpush1.msra.mxu0 0.0
    %542 = vmatprep.subr.mxu0 0.0
    %543 = vmatpush1.msra.mxu0 0.0
    %544 = vmatprep.subr.mxu0 0.0
    %545 = vmatpush1.msra.mxu0 0.0
    %546 = vmatprep.subr.mxu0 0.0
    %547 = vmatpush1.msra.mxu0 0.0
    %548 = vmatprep.subr.mxu0 0.0
    %549 = vmatpush1.msra.mxu0 0.0
    %550 = vmatprep.subr.mxu0 0.0
    %551 = vmatpush1.msra.mxu0 0.0
    %552 = vmatprep.subr.mxu0 0.0
    %553 = vmatpush1.msra.mxu0 0.0
    %554 = vmatprep.subr.mxu0 0.0
    %555 = vmatpush1.msra.mxu0 0.0
    %556 = vmatprep.subr.mxu0 0.0
    %557 = vmatpush1.msra.mxu0 0.0
    %558 = vmatprep.subr.mxu0 0.0
    %559 = vmatpush1.msra.mxu0 0.0
    %560 = vmatprep.subr.mxu0 0.0
    %561 = vmatpush1.msra.mxu0 0.0
    %562 = vmatprep.subr.mxu0 0.0
    %563 = vmatpush1.msra.mxu0 0.0
    %564 = vmatprep.subr.mxu0 0.0
    %565 = vmatpush1.msra.mxu0 0.0
    %566 = vmatprep.subr.mxu0 0.0
    %567 = vmatpush1.msra.mxu0 0.0
    %568 = vmatprep.subr.mxu0 0.0
    %569 = vmatpush1.msra.mxu0 0.0
    %570 = vmatprep.subr.mxu0 0.0
    %571 = vmatpush1.msra.mxu0 0.0
    %572 = vmatprep.subr.mxu0 0.0
    %573 = vmatpush1.msra.mxu0 0.0
    %574 = vmatprep.subr.mxu0 0.0
    %575 = vmatpush1.msra.mxu0 0.0
    %576 = vmatprep.subr.mxu0 0.0
    %577 = vmatpush1.msra.mxu0 0.0
    %578 = vmatprep.subr.mxu0 0.0
    %579 = vmatpush1.msra.mxu0 0.0
    %580 = vmatprep.subr.mxu0 0.0
    %581 = vmatpush1.msra.mxu0 0.0
    %582 = vmatprep.subr.mxu0 0.0
    %583 = vmatpush1.msra.mxu0 0.0
    %584 = vmatprep.subr.mxu0 0.0
    %585 = vmatpush1.msra.mxu0 0.0
    %586 = vmatprep.subr.mxu0 0.0
    %587 = vmatpush1.msra.mxu0 0.0
    %588 = vmatprep.subr.mxu0 0.0
    %589 = vmatpush1.msra.mxu0 0.0
    %590 = vmatprep.subr.mxu0 0.0
    %591 = vmatpush1.msra.mxu0 0.0
    %592 = vmatprep.subr.mxu0 0.0
    %593 = vmatpush1.msra.mxu0 0.0
    %594 = vmatprep.subr.mxu0 0.0
    %595 = vmatpush1.msra.mxu0 0.0
    %596 = vmatprep.mubr.f32.mxu0 0.0
    %597 = vmatmul.mubr.f32.gmra.mrb[0].mxu0 %v530
    %v598 = vpop.f32.mrb[0].mxu0
    %v599 = vadd.f32 0.0, %v598
    %v600 = vpop.f32.mrb[0].mxu0
    %601 = vdwg.mxu0
    %v602 = vadd.f32 %v525, %v599
    %v603 = vtanh.pop %v602
    %v604 = vxor.u32 %v602, 2147483648
    %v605 = vmul.f32 %v604, 1.442695
    %v606 = vpow.pop %v605
    %v607 = vadd.f32 %v606, 1.0
    %v608 = vrcp.pop %v607
    %v609 = vmul.f32 1.0, %v608
    %v610 = vsel %vm188, %v603, %v609
    %v611 = vmul.f32 %v610, %v511
    %613 = vrot.lane.b32.xlu0 %v610, 64
    %v614 = vpop.permute.xlu0 %613
    %v616 = vmul.f32 %v610, %v614
    %618 = vrot.lane.b32.xlu0 %v616, 32
    %v619 = vpop.permute.xlu0 %618
    %v621 = vadd.f32 %v611, %v619
    %v622 = vtanh.pop %v621
    %624 = vrot.lane.b32.xlu0 %v622, 64
    %v625 = vpop.permute.xlu0 %624
    %v627 = vmul.f32 %v610, %v625
    %629 = vrot.lane.b32.xlu0 %v627, 32
    %v630 = vpop.permute.xlu0 %629
    %s632 = scalar_lea.vmem %s4, 24
    %633 = vst.msk [vmem:[%s632] sm:$0xff] %vm46, %v630
    %s634 = scalar_lea.vmem [#allocation4], 32
    %v635 = vld [vmem:[%s634] sm:$0xff]
    %v636 = vld [vmem:[%s2] sm:$0xff]
    %v637 = vld [vmem:[%s2 + $0x8] sm:$0xff]
    %v638 = vld [vmem:[%s2 + $0x10] sm:$0xff]
    %v639 = vld [vmem:[%s2 + $0x18] sm:$0xff]
    %v640 = vsel %vm46, %v630, 0
    %642 = vmatprep.subr.mxu0 0.0
    %643 = vmatpush1.msra.mxu0 %v636
    %644 = vmatprep.subr.mxu0 0.0
    %645 = vmatpush1.msra.mxu0 %v637
    %646 = vmatprep.subr.mxu0 0.0
    %647 = vmatpush1.msra.mxu0 %v638
    %648 = vmatprep.subr.mxu0 0.0
    %649 = vmatpush1.msra.mxu0 %v639
    %650 = vmatprep.subr.mxu0 0.0
    %651 = vmatpush1.msra.mxu0 0.0
    %652 = vmatprep.subr.mxu0 0.0
    %653 = vmatpush1.msra.mxu0 0.0
    %654 = vmatprep.subr.mxu0 0.0
    %655 = vmatpush1.msra.mxu0 0.0
    %656 = vmatprep.subr.mxu0 0.0
    %657 = vmatpush1.msra.mxu0 0.0
    %658 = vmatprep.subr.mxu0 0.0
    %659 = vmatpush1.msra.mxu0 0.0
    %660 = vmatprep.subr.mxu0 0.0
    %661 = vmatpush1.msra.mxu0 0.0
    %662 = vmatprep.subr.mxu0 0.0
    %663 = vmatpush1.msra.mxu0 0.0
    %664 = vmatprep.subr.mxu0 0.0
    %665 = vmatpush1.msra.mxu0 0.0
    %666 = vmatprep.subr.mxu0 0.0
    %667 = vmatpush1.msra.mxu0 0.0
    %668 = vmatprep.subr.mxu0 0.0
    %669 = vmatpush1.msra.mxu0 0.0
    %670 = vmatprep.subr.mxu0 0.0
    %671 = vmatpush1.msra.mxu0 0.0
    %672 = vmatprep.subr.mxu0 0.0
    %673 = vmatpush1.msra.mxu0 0.0
    %674 = vmatprep.subr.mxu0 0.0
    %675 = vmatpush1.msra.mxu0 0.0
    %676 = vmatprep.subr.mxu0 0.0
    %677 = vmatpush1.msra.mxu0 0.0
    %678 = vmatprep.subr.mxu0 0.0
    %679 = vmatpush1.msra.mxu0 0.0
    %680 = vmatprep.subr.mxu0 0.0
    %681 = vmatpush1.msra.mxu0 0.0
    %682 = vmatprep.subr.mxu0 0.0
    %683 = vmatpush1.msra.mxu0 0.0
    %684 = vmatprep.subr.mxu0 0.0
    %685 = vmatpush1.msra.mxu0 0.0
    %686 = vmatprep.subr.mxu0 0.0
    %687 = vmatpush1.msra.mxu0 0.0
    %688 = vmatprep.subr.mxu0 0.0
    %689 = vmatpush1.msra.mxu0 0.0
    %690 = vmatprep.subr.mxu0 0.0
    %691 = vmatpush1.msra.mxu0 0.0
    %692 = vmatprep.subr.mxu0 0.0
    %693 = vmatpush1.msra.mxu0 0.0
    %694 = vmatprep.subr.mxu0 0.0
    %695 = vmatpush1.msra.mxu0 0.0
    %696 = vmatprep.subr.mxu0 0.0
    %697 = vmatpush1.msra.mxu0 0.0
    %698 = vmatprep.subr.mxu0 0.0
    %699 = vmatpush1.msra.mxu0 0.0
    %700 = vmatprep.subr.mxu0 0.0
    %701 = vmatpush1.msra.mxu0 0.0
    %702 = vmatprep.subr.mxu0 0.0
    %703 = vmatpush1.msra.mxu0 0.0
    %704 = vmatprep.subr.mxu0 0.0
    %705 = vmatpush1.msra.mxu0 0.0
    %706 = vmatprep.mubr.f32.mxu0 0.0
    %707 = vmatmul.mubr.f32.gmra.mrb[0].mxu0 %v640
    %v708 = vpop.f32.mrb[0].mxu0
    %v709 = vadd.f32 0.0, %v708
    %v710 = vpop.f32.mrb[0].mxu0
    %711 = vdwg.mxu0
    %v712 = vadd.f32 %v635, %v709
    %v713 = vtanh.pop %v712
    %v714 = vxor.u32 %v712, 2147483648
    %v715 = vmul.f32 %v714, 1.442695
    %v716 = vpow.pop %v715
    %v717 = vadd.f32 %v716, 1.0
    %v718 = vrcp.pop %v717
    %v719 = vmul.f32 1.0, %v718
    %v720 = vsel %vm188, %v713, %v719
    %v721 = vmul.f32 %v720, %v621
    %723 = vrot.lane.b32.xlu0 %v720, 64
    %v724 = vpop.permute.xlu0 %723
    %v726 = vmul.f32 %v720, %v724
    %728 = vrot.lane.b32.xlu0 %v726, 32
    %v729 = vpop.permute.xlu0 %728
    %v731 = vadd.f32 %v721, %v729
    %v732 = vtanh.pop %v731
    %734 = vrot.lane.b32.xlu0 %v732, 64
    %v735 = vpop.permute.xlu0 %734
    %v737 = vmul.f32 %v720, %v735
    %739 = vrot.lane.b32.xlu0 %v737, 32
    %v740 = vpop.permute.xlu0 %739
    %s742 = scalar_lea.vmem %s4, 32
    %743 = vst.msk [vmem:[%s742] sm:$0xff] %vm46, %v740
    %s744 = scalar_lea.vmem [#allocation4], 40
    %v745 = vld [vmem:[%s744] sm:$0xff]
    %v746 = vld [vmem:[%s2] sm:$0xff]
    %v747 = vld [vmem:[%s2 + $0x8] sm:$0xff]
    %v748 = vld [vmem:[%s2 + $0x10] sm:$0xff]
    %v749 = vld [vmem:[%s2 + $0x18] sm:$0xff]
    %v750 = vsel %vm46, %v740, 0
    %752 = vmatprep.subr.mxu0 0.0
    %753 = vmatpush1.msra.mxu0 %v746
    %754 = vmatprep.subr.mxu0 0.0
    %755 = vmatpush1.msra.mxu0 %v747
    %756 = vmatprep.subr.mxu0 0.0
    %757 = vmatpush1.msra.mxu0 %v748
    %758 = vmatprep.subr.mxu0 0.0
    %759 = vmatpush1.msra.mxu0 %v749
    %760 = vmatprep.subr.mxu0 0.0
    %761 = vmatpush1.msra.mxu0 0.0
    %762 = vmatprep.subr.mxu0 0.0
    %763 = vmatpush1.msra.mxu0 0.0
    %764 = vmatprep.subr.mxu0 0.0
    %765 = vmatpush1.msra.mxu0 0.0
    %766 = vmatprep.subr.mxu0 0.0
    %767 = vmatpush1.msra.mxu0 0.0
    %768 = vmatprep.subr.mxu0 0.0
    %769 = vmatpush1.msra.mxu0 0.0
    %770 = vmatprep.subr.mxu0 0.0
    %771 = vmatpush1.msra.mxu0 0.0
    %772 = vmatprep.subr.mxu0 0.0
    %773 = vmatpush1.msra.mxu0 0.0
    %774 = vmatprep.subr.mxu0 0.0
    %775 = vmatpush1.msra.mxu0 0.0
    %776 = vmatprep.subr.mxu0 0.0
    %777 = vmatpush1.msra.mxu0 0.0
    %778 = vmatprep.subr.mxu0 0.0
    %779 = vmatpush1.msra.mxu0 0.0
    %780 = vmatprep.subr.mxu0 0.0
    %781 = vmatpush1.msra.mxu0 0.0
    %782 = vmatprep.subr.mxu0 0.0
    %783 = vmatpush1.msra.mxu0 0.0
    %784 = vmatprep.subr.mxu0 0.0
    %785 = vmatpush1.msra.mxu0 0.0
    %786 = vmatprep.subr.mxu0 0.0
    %787 = vmatpush1.msra.mxu0 0.0
    %788 = vmatprep.subr.mxu0 0.0
    %789 = vmatpush1.msra.mxu0 0.0
    %790 = vmatprep.subr.mxu0 0.0
    %791 = vmatpush1.msra.mxu0 0.0
    %792 = vmatprep.subr.mxu0 0.0
    %793 = vmatpush1.msra.mxu0 0.0
    %794 = vmatprep.subr.mxu0 0.0
    %795 = vmatpush1.msra.mxu0 0.0
    %796 = vmatprep.subr.mxu0 0.0
    %797 = vmatpush1.msra.mxu0 0.0
    %798 = vmatprep.subr.mxu0 0.0
    %799 = vmatpush1.msra.mxu0 0.0
    %800 = vmatprep.subr.mxu0 0.0
    %801 = vmatpush1.msra.mxu0 0.0
    %802 = vmatprep.subr.mxu0 0.0
    %803 = vmatpush1.msra.mxu0 0.0
    %804 = vmatprep.subr.mxu0 0.0
    %805 = vmatpush1.msra.mxu0 0.0
    %806 = vmatprep.subr.mxu0 0.0
    %807 = vmatpush1.msra.mxu0 0.0
    %808 = vmatprep.subr.mxu0 0.0
    %809 = vmatpush1.msra.mxu0 0.0
    %810 = vmatprep.subr.mxu0 0.0
    %811 = vmatpush1.msra.mxu0 0.0
    %812 = vmatprep.subr.mxu0 0.0
    %813 = vmatpush1.msra.mxu0 0.0
    %814 = vmatprep.subr.mxu0 0.0
    %815 = vmatpush1.msra.mxu0 0.0
    %816 = vmatprep.mubr.f32.mxu0 0.0
    %817 = vmatmul.mubr.f32.gmra.mrb[0].mxu0 %v750
    %v818 = vpop.f32.mrb[0].mxu0
    %v819 = vadd.f32 0.0, %v818
    %v820 = vpop.f32.mrb[0].mxu0
    %821 = vdwg.mxu0
    %v822 = vadd.f32 %v745, %v819
    %v823 = vtanh.pop %v822
    %v824 = vxor.u32 %v822, 2147483648
    %v825 = vmul.f32 %v824, 1.442695
    %v826 = vpow.pop %v825
    %v827 = vadd.f32 %v826, 1.0
    %v828 = vrcp.pop %v827
    %v829 = vmul.f32 1.0, %v828
    %v830 = vsel %vm188, %v823, %v829
    %v831 = vmul.f32 %v830, %v731
    %833 = vrot.lane.b32.xlu0 %v830, 64
    %v834 = vpop.permute.xlu0 %833
    %v836 = vmul.f32 %v830, %v834
    %838 = vrot.lane.b32.xlu0 %v836, 32
    %v839 = vpop.permute.xlu0 %838
    %v841 = vadd.f32 %v831, %v839
    %v842 = vtanh.pop %v841
    %844 = vrot.lane.b32.xlu0 %v842, 64
    %v845 = vpop.permute.xlu0 %844
    %v847 = vmul.f32 %v830, %v845
    %849 = vrot.lane.b32.xlu0 %v847, 32
    %v850 = vpop.permute.xlu0 %849
    %s852 = scalar_lea.vmem %s4, 40
    %853 = vst.msk [vmem:[%s852] sm:$0xff] %vm46, %v850
    %s854 = scalar_lea.vmem [#allocation4], 48
    %v855 = vld [vmem:[%s854] sm:$0xff]
    %v856 = vld [vmem:[%s2] sm:$0xff]
    %v857 = vld [vmem:[%s2 + $0x8] sm:$0xff]
    %v858 = vld [vmem:[%s2 + $0x10] sm:$0xff]
    %v859 = vld [vmem:[%s2 + $0x18] sm:$0xff]
    %v860 = vsel %vm46, %v850, 0
    %862 = vmatprep.subr.mxu0 0.0
    %863 = vmatpush1.msra.mxu0 %v856
    %864 = vmatprep.subr.mxu0 0.0
    %865 = vmatpush1.msra.mxu0 %v857
    %866 = vmatprep.subr.mxu0 0.0
    %867 = vmatpush1.msra.mxu0 %v858
    %868 = vmatprep.subr.mxu0 0.0
    %869 = vmatpush1.msra.mxu0 %v859
    %870 = vmatprep.subr.mxu0 0.0
    %871 = vmatpush1.msra.mxu0 0.0
    %872 = vmatprep.subr.mxu0 0.0
    %873 = vmatpush1.msra.mxu0 0.0
    %874 = vmatprep.subr.mxu0 0.0
    %875 = vmatpush1.msra.mxu0 0.0
    %876 = vmatprep.subr.mxu0 0.0
    %877 = vmatpush1.msra.mxu0 0.0
    %878 = vmatprep.subr.mxu0 0.0
    %879 = vmatpush1.msra.mxu0 0.0
    %880 = vmatprep.subr.mxu0 0.0
    %881 = vmatpush1.msra.mxu0 0.0
    %882 = vmatprep.subr.mxu0 0.0
    %883 = vmatpush1.msra.mxu0 0.0
    %884 = vmatprep.subr.mxu0 0.0
    %885 = vmatpush1.msra.mxu0 0.0
    %886 = vmatprep.subr.mxu0 0.0
    %887 = vmatpush1.msra.mxu0 0.0
    %888 = vmatprep.subr.mxu0 0.0
    %889 = vmatpush1.msra.mxu0 0.0
    %890 = vmatprep.subr.mxu0 0.0
    %891 = vmatpush1.msra.mxu0 0.0
    %892 = vmatprep.subr.mxu0 0.0
    %893 = vmatpush1.msra.mxu0 0.0
    %894 = vmatprep.subr.mxu0 0.0
    %895 = vmatpush1.msra.mxu0 0.0
    %896 = vmatprep.subr.mxu0 0.0
    %897 = vmatpush1.msra.mxu0 0.0
    %898 = vmatprep.subr.mxu0 0.0
    %899 = vmatpush1.msra.mxu0 0.0
    %900 = vmatprep.subr.mxu0 0.0
    %901 = vmatpush1.msra.mxu0 0.0
    %902 = vmatprep.subr.mxu0 0.0
    %903 = vmatpush1.msra.mxu0 0.0
    %904 = vmatprep.subr.mxu0 0.0
    %905 = vmatpush1.msra.mxu0 0.0
    %906 = vmatprep.subr.mxu0 0.0
    %907 = vmatpush1.msra.mxu0 0.0
    %908 = vmatprep.subr.mxu0 0.0
    %909 = vmatpush1.msra.mxu0 0.0
    %910 = vmatprep.subr.mxu0 0.0
    %911 = vmatpush1.msra.mxu0 0.0
    %912 = vmatprep.subr.mxu0 0.0
    %913 = vmatpush1.msra.mxu0 0.0
    %914 = vmatprep.subr.mxu0 0.0
    %915 = vmatpush1.msra.mxu0 0.0
    %916 = vmatprep.subr.mxu0 0.0
    %917 = vmatpush1.msra.mxu0 0.0
    %918 = vmatprep.subr.mxu0 0.0
    %919 = vmatpush1.msra.mxu0 0.0
    %920 = vmatprep.subr.mxu0 0.0
    %921 = vmatpush1.msra.mxu0 0.0
    %922 = vmatprep.subr.mxu0 0.0
    %923 = vmatpush1.msra.mxu0 0.0
    %924 = vmatprep.subr.mxu0 0.0
    %925 = vmatpush1.msra.mxu0 0.0
    %926 = vmatprep.mubr.f32.mxu0 0.0
    %927 = vmatmul.mubr.f32.gmra.mrb[0].mxu0 %v860
    %v928 = vpop.f32.mrb[0].mxu0
    %v929 = vadd.f32 0.0, %v928
    %v930 = vpop.f32.mrb[0].mxu0
    %931 = vdwg.mxu0
    %v932 = vadd.f32 %v855, %v929
    %v933 = vtanh.pop %v932
    %v934 = vxor.u32 %v932, 2147483648
    %v935 = vmul.f32 %v934, 1.442695
    %v936 = vpow.pop %v935
    %v937 = vadd.f32 %v936, 1.0
    %v938 = vrcp.pop %v937
    %v939 = vmul.f32 1.0, %v938
    %v940 = vsel %vm188, %v933, %v939
    %v941 = vmul.f32 %v940, %v841
    %943 = vrot.lane.b32.xlu0 %v940, 64
    %v944 = vpop.permute.xlu0 %943
    %v946 = vmul.f32 %v940, %v944
    %948 = vrot.lane.b32.xlu0 %v946, 32
    %v949 = vpop.permute.xlu0 %948
    %v951 = vadd.f32 %v941, %v949
    %v952 = vtanh.pop %v951
    %954 = vrot.lane.b32.xlu0 %v952, 64
    %v955 = vpop.permute.xlu0 %954
    %v957 = vmul.f32 %v940, %v955
    %959 = vrot.lane.b32.xlu0 %v957, 32
    %v960 = vpop.permute.xlu0 %959
    %s962 = scalar_lea.vmem %s4, 48
    %963 = vst.msk [vmem:[%s962] sm:$0xff] %vm46, %v960
    %s964 = scalar_lea.vmem [#allocation4], 56
    %v965 = vld [vmem:[%s964] sm:$0xff]
    %v966 = vld [vmem:[%s2] sm:$0xff]
    %v967 = vld [vmem:[%s2 + $0x8] sm:$0xff]
    %v968 = vld [vmem:[%s2 + $0x10] sm:$0xff]
    %v969 = vld [vmem:[%s2 + $0x18] sm:$0xff]
    %v970 = vsel %vm46, %v960, 0
    %972 = vmatprep.subr.mxu0 0.0
    %973 = vmatpush1.msra.mxu0 %v966
    %974 = vmatprep.subr.mxu0 0.0
    %975 = vmatpush1.msra.mxu0 %v967
    %976 = vmatprep.subr.mxu0 0.0
    %977 = vmatpush1.msra.mxu0 %v968
    %978 = vmatprep.subr.mxu0 0.0
    %979 = vmatpush1.msra.mxu0 %v969
    %980 = vmatprep.subr.mxu0 0.0
    %981 = vmatpush1.msra.mxu0 0.0
    %982 = vmatprep.subr.mxu0 0.0
    %983 = vmatpush1.msra.mxu0 0.0
    %984 = vmatprep.subr.mxu0 0.0
    %985 = vmatpush1.msra.mxu0 0.0
    %986 = vmatprep.subr.mxu0 0.0
    %987 = vmatpush1.msra.mxu0 0.0
    %988 = vmatprep.subr.mxu0 0.0
    %989 = vmatpush1.msra.mxu0 0.0
    %990 = vmatprep.subr.mxu0 0.0
    %991 = vmatpush1.msra.mxu0 0.0
    %992 = vmatprep.subr.mxu0 0.0
    %993 = vmatpush1.msra.mxu0 0.0
    %994 = vmatprep.subr.mxu0 0.0
    %995 = vmatpush1.msra.mxu0 0.0
    %996 = vmatprep.subr.mxu0 0.0
    %997 = vmatpush1.msra.mxu0 0.0
    %998 = vmatprep.subr.mxu0 0.0
    %999 = vmatpush1.msra.mxu0 0.0
    %1000 = vmatprep.subr.mxu0 0.0
    %1001 = vmatpush1.msra.mxu0 0.0
    %1002 = vmatprep.subr.mxu0 0.0
    %1003 = vmatpush1.msra.mxu0 0.0
    %1004 = vmatprep.subr.mxu0 0.0
    %1005 = vmatpush1.msra.mxu0 0.0
    %1006 = vmatprep.subr.mxu0 0.0
    %1007 = vmatpush1.msra.mxu0 0.0
    %1008 = vmatprep.subr.mxu0 0.0
    %1009 = vmatpush1.msra.mxu0 0.0
    %1010 = vmatprep.subr.mxu0 0.0
    %1011 = vmatpush1.msra.mxu0 0.0
    %1012 = vmatprep.subr.mxu0 0.0
    %1013 = vmatpush1.msra.mxu0 0.0
    %1014 = vmatprep.subr.mxu0 0.0
    %1015 = vmatpush1.msra.mxu0 0.0
    %1016 = vmatprep.subr.mxu0 0.0
    %1017 = vmatpush1.msra.mxu0 0.0
    %1018 = vmatprep.subr.mxu0 0.0
    %1019 = vmatpush1.msra.mxu0 0.0
    %1020 = vmatprep.subr.mxu0 0.0
    %1021 = vmatpush1.msra.mxu0 0.0
    %1022 = vmatprep.subr.mxu0 0.0
    %1023 = vmatpush1.msra.mxu0 0.0
    %1024 = vmatprep.subr.mxu0 0.0
    %1025 = vmatpush1.msra.mxu0 0.0
    %1026 = vmatprep.subr.mxu0 0.0
    %1027 = vmatpush1.msra.mxu0 0.0
    %1028 = vmatprep.subr.mxu0 0.0
    %1029 = vmatpush1.msra.mxu0 0.0
    %1030 = vmatprep.subr.mxu0 0.0
    %1031 = vmatpush1.msra.mxu0 0.0
    %1032 = vmatprep.subr.mxu0 0.0
    %1033 = vmatpush1.msra.mxu0 0.0
    %1034 = vmatprep.subr.mxu0 0.0
    %1035 = vmatpush1.msra.mxu0 0.0
    %1036 = vmatprep.mubr.f32.mxu0 0.0
    %1037 = vmatmul.mubr.f32.gmra.mrb[0].mxu0 %v970
    %v1038 = vpop.f32.mrb[0].mxu0
    %v1039 = vadd.f32 0.0, %v1038
    %v1040 = vpop.f32.mrb[0].mxu0
    %1041 = vdwg.mxu0
    %v1042 = vadd.f32 %v965, %v1039
    %v1043 = vtanh.pop %v1042
    %v1044 = vxor.u32 %v1042, 2147483648
    %v1045 = vmul.f32 %v1044, 1.442695
    %v1046 = vpow.pop %v1045
    %v1047 = vadd.f32 %v1046, 1.0
    %v1048 = vrcp.pop %v1047
    %v1049 = vmul.f32 1.0, %v1048
    %v1050 = vsel %vm188, %v1043, %v1049
    %v1051 = vmul.f32 %v1050, %v951
    %1053 = vrot.lane.b32.xlu0 %v1050, 64
    %v1054 = vpop.permute.xlu0 %1053
    %v1056 = vmul.f32 %v1050, %v1054
    %1058 = vrot.lane.b32.xlu0 %v1056, 32
    %v1059 = vpop.permute.xlu0 %1058
    %v1061 = vadd.f32 %v1051, %v1059
    %v1062 = vtanh.pop %v1061
    %1064 = vrot.lane.b32.xlu0 %v1062, 64
    %v1065 = vpop.permute.xlu0 %1064
    %v1067 = vmul.f32 %v1050, %v1065
    %1069 = vrot.lane.b32.xlu0 %v1067, 32
    %v1070 = vpop.permute.xlu0 %1069
    %s1072 = scalar_lea.vmem %s4, 56
    %1073 = vst.msk [vmem:[%s1072] sm:$0xff] %vm46, %v1070
    %1074 = vst.msk [vmem:[#allocation2] sm:$0xff] %vm46, %v1070
    %1076 = vrot.lane.b32.xlu0 %v1061, 96
    %v1077 = vpop.permute.xlu0 %1076
    %1079 = vst.msk [vmem:[#allocation3] sm:$0xff] %vm46, %v1077
    // Predicated region
    $region22: #{_lambda_.1} parent=1 // pred_check
      %p1080 = pneg %p20
    $region23: #{_lambda_.1} parent=1 // pred_check_branch
      %1082 = sbr.rel (%p1080) target = $region25
    $region24: #{_lambda_.1} parent=1 // pred_region
      %1083 = vst.msk [vmem:[#allocation5] sm:$0xff] %vm46, %v1077
    $region25: #{_lambda_.1} parent=1 // pred_fallthru
      _
    // Predicated region
    $region26: #{_lambda_.1} parent=1 // pred_check
      _
    $region27: #{_lambda_.1} parent=1 // pred_check_branch
      %1085 = sbr.rel (0) target = $region29
    $region28: #{_lambda_.1} parent=1 // pred_region
      _
    $region29: #{_lambda_.1} parent=1 // pred_fallthru
      _
    // Predicated region
    $region30: #{_lambda_.1} parent=1 // pred_check
      _
    $region31: #{_lambda_.1} parent=1 // pred_check_branch
      %1087 = sbr.rel (0) target = $region33
    $region32: #{_lambda_.1} parent=1 // pred_region
      %s1089 = ssub.s32 128, 128
      %1090 = vsyncadd [#allocation6], %s1089
      %s1092 = sshll.u32 [#allocation5], 4
      %s1093 = int_to_ptr.vmem [resolvable:$true] %s1092
      %1095 = dma.vmem_to_hbm [thread:$0]  %s1093, 128, %s5, [#allocation6]
    $region33: #{_lambda_.1} parent=1 // pred_fallthru
      _
    // Predicated region
    $region34: #{_lambda_.1} parent=1 // pred_check
      _
    $region35: #{_lambda_.1} parent=1 // pred_check_branch
      %1097 = sbr.rel (0) target = $region37
    $region36: #{_lambda_.1} parent=1 // pred_region
      _
    $region37: #{_lambda_.1} parent=1 // pred_fallthru
      _
    // Predicated region
    $region38: #{_lambda_.1} parent=1 // pred_check
      _
    $region39: #{_lambda_.1} parent=1 // pred_check_branch
      %1099 = sbr.rel (0) target = $region41
    $region40: #{_lambda_.1} parent=1 // pred_region
      %1100 = dma.done [#allocation6], 128
    $region41: #{_lambda_.1} parent=1 // pred_fallthru
      _
    %1101 = vsyncpa [#allocation6], 1

</llo_original>
